<compile_context>
chip_gen: v7x
topology: tpu7x:2x2x1
jax: 0.10.0
libtpu: 0.0.40
codegen_flags: <defaults>
</compile_context>

<pallas_src>
import jax
import jax.numpy as jnp
from jax.experimental import pallas as pl
from jax.experimental.pallas import tpu as pltpu


def _round_up(x, m):
    return ((x + m - 1) // m) * m


# ----------------------------------------------------------------------------
# Fused kernel: both coupling steps, s+t MLPs fused, packed/padded weights.
#   w_ref: [12, P, P]  (per step: W0a, W0b, W1, W2, W3s, W3t)
#   b_ref: [12, 1, P]  (bias paired with each weight; index 1 is all-zero)
# ----------------------------------------------------------------------------
def _make_block_kernel(nmat_per_step: int, reverse: bool):

    def fused_mlp(w_ref, b_ref, base, x_apply, x_cond):
        def lin(j, h):
            return (jnp.dot(h, w_ref[base + j],
                            preferred_element_type=jnp.float32)
                    + b_ref[base + j])

        h = lin(0, x_apply) + lin(1, x_cond)          # layer 0 (split conditioner)
        h = jnp.where(h > 0, h, 0.01 * h)             # LeakyReLU(0.01)
        h = lin(2, h)
        h = jnp.where(h > 0, h, 0.01 * h)
        h = lin(3, h)
        h = jnp.where(h > 0, h, 0.01 * h)
        scale = lin(4, h)                              # fused s-head
        t = lin(5, h)                                  # fused t-head
        return scale, t

    if not reverse:
        def kernel(xa_ref, xb_ref, xc_ref, w_ref, b_ref, ya_ref, yb_ref, ld_ref):
            xa = xa_ref[...]
            xb = xb_ref[...]
            xc = xc_ref[...]
            # step 0: condition on (xa, xc), transform xb
            s0, t0 = fused_mlp(w_ref, b_ref, 0, xa, xc)
            y0 = xb * jnp.exp(s0) + t0
            # step 1 (after half-swap): condition on (y0, xc), transform xa
            s1, t1 = fused_mlp(w_ref, b_ref, nmat_per_step, y0, xc)
            y1 = xa * jnp.exp(s1) + t1
            ya_ref[...] = y0
            yb_ref[...] = y1
            # padded scale columns are exactly zero, so the full-row sum is exact
            ld = jnp.sum(s0 + s1, axis=1, keepdims=True)
            ld_ref[...] = jnp.broadcast_to(ld, ld_ref.shape)   # lane-dense store
    else:
        def kernel(xa_ref, xb_ref, xc_ref, w_ref, b_ref, ya_ref, yb_ref):
            u0 = xa_ref[...]
            u1 = xb_ref[...]
            xc = xc_ref[...]
            # inverse of step 1
            s1, t1 = fused_mlp(w_ref, b_ref, nmat_per_step, u0, xc)
            r1 = (u1 - t1) * jnp.exp(-s1)
            # inverse of step 0
            s0, t0 = fused_mlp(w_ref, b_ref, 0, r1, xc)
            r0 = (u0 - t0) * jnp.exp(-s0)
            ya_ref[...] = r1
            yb_ref[...] = r0

    return kernel


def _fused_block_call(xa_p, xb_p, xc_p, w_slab, b_slab, *, tb, reverse):
    bp, p = xa_p.shape
    nmat = w_slab.shape[0]
    grid = (bp // tb,)

    row_spec = pl.BlockSpec((tb, p), lambda i: (i, 0))
    w_spec = pl.BlockSpec((nmat, p, p), lambda i: (0, 0, 0))   # VMEM-resident
    b_spec = pl.BlockSpec((nmat, 1, p), lambda i: (0, 0, 0))
    in_specs = [row_spec, row_spec, row_spec, w_spec, b_spec]

    if not reverse:
        out_shape = (jax.ShapeDtypeStruct((bp, p), jnp.float32),
                     jax.ShapeDtypeStruct((bp, p), jnp.float32),
                     jax.ShapeDtypeStruct((bp, 128), jnp.float32))
        out_specs = (row_spec, row_spec,
                     pl.BlockSpec((tb, 128), lambda i: (i, 0)))
    else:
        out_shape = (jax.ShapeDtypeStruct((bp, p), jnp.float32),
                     jax.ShapeDtypeStruct((bp, p), jnp.float32))
        out_specs = (row_spec, row_spec)

    return pl.pallas_call(
        _make_block_kernel(nmat // 2, reverse),
        out_shape=out_shape,
        grid=grid,
        in_specs=in_specs,
        out_specs=out_specs,
        compiler_params=pltpu.CompilerParams(
            dimension_semantics=("parallel",)),
    )(xa_p, xb_p, xc_p, w_slab, b_slab)


# ----------------------------------------------------------------------------
# Parameter init (synthetic weights; shapes match the PyTorch module) + packing.
# ----------------------------------------------------------------------------
def _init_mlp_params(key, dim, hidden, out_dim):
    sizes = [(dim, hidden), (hidden, hidden), (hidden, hidden), (hidden, out_dim)]
    params = []
    for din, dout in sizes:
        key, kw, kb = jax.random.split(key, 3)
        params.append(jax.random.normal(kw, (din, dout), jnp.float32) * 0.1)
        params.append(jax.random.normal(kb, (1, dout), jnp.float32) * 0.1)
    return tuple(params), key


def init_block_params(key, in_channels, cond_channels, hidden_dim, mode='normal'):
    half = in_channels // 2
    dim = half + cond_channels if mode == 'normal' else cond_channels
    s_params, t_params = [], []
    for _ in range(2):
        p, key = _init_mlp_params(key, dim, hidden_dim, half)
        s_params.append(p)
    for _ in range(2):
        p, key = _init_mlp_params(key, dim, hidden_dim, half)
        t_params.append(p)
    return {'s': s_params, 't': t_params}


def pack_block_params(raw, in_channels, cond_channels, hidden_dim, mode='normal'):
    """Pack the 2x(s,t) MLPs into lane-padded fused slabs.

    Per step, 6 [P,P] matrices: W0a (from xa), W0b (from xc), W1, W2 (block-
    diagonal over the s|t fused hidden), W3s (-> scale), W3t (-> t).
    """
    half = in_channels // 2
    h = hidden_dim
    P = max(_round_up(half, 128), _round_up(cond_channels, 128),
            _round_up(2 * h, 128))
    w_slab = jnp.zeros((12, P, P), jnp.float32)
    b_slab = jnp.zeros((12, 1, P), jnp.float32)

    for step in range(2):
        sw0, sb0, sw1, sb1, sw2, sb2, sw3, sb3 = raw['s'][step]
        tw0, tb0, tw1, tb1, tw2, tb2, tw3, tb3 = raw['t'][step]
        base = 6 * step
        if mode == 'normal':
            w_slab = w_slab.at[base + 0, :half, :h].set(sw0[:half])
            w_slab = w_slab.at[base + 0, :half, h:2 * h].set(tw0[:half])
            w_slab = w_slab.at[base + 1, :cond_channels, :h].set(sw0[half:])
            w_slab = w_slab.at[base + 1, :cond_channels, h:2 * h].set(tw0[half:])
        else:
            w_slab = w_slab.at[base + 1, :cond_channels, :h].set(sw0)
            w_slab = w_slab.at[base + 1, :cond_channels, h:2 * h].set(tw0)
        b_slab = b_slab.at[base + 0, 0, :h].set(sb0[0])
        b_slab = b_slab.at[base + 0, 0, h:2 * h].set(tb0[0])
        # hidden layers, block-diagonal over the fused s|t hidden
        w_slab = w_slab.at[base + 2, :h, :h].set(sw1)
        w_slab = w_slab.at[base + 2, h:2 * h, h:2 * h].set(tw1)
        b_slab = b_slab.at[base + 2, 0, :h].set(sb1[0])
        b_slab = b_slab.at[base + 2, 0, h:2 * h].set(tb1[0])
        w_slab = w_slab.at[base + 3, :h, :h].set(sw2)
        w_slab = w_slab.at[base + 3, h:2 * h, h:2 * h].set(tw2)
        b_slab = b_slab.at[base + 3, 0, :h].set(sb2[0])
        b_slab = b_slab.at[base + 3, 0, h:2 * h].set(tb2[0])
        # output heads
        w_slab = w_slab.at[base + 4, :h, :half].set(sw3)
        b_slab = b_slab.at[base + 4, 0, :half].set(sb3[0])
        w_slab = w_slab.at[base + 5, h:2 * h, :half].set(tw3)
        b_slab = b_slab.at[base + 5, 0, :half].set(tb3[0])

    return {'w': w_slab, 'b': b_slab, 'P': P, 'half': half,
            'cond_channels': cond_channels}


# ----------------------------------------------------------------------------
# Module forward (padding/slicing glue in plain JAX, full hot path in Pallas).
# ----------------------------------------------------------------------------
def conditional_double_vector_coupling_forward(x, xc, packed, reverse=False):
    assert x.ndim == 4 and xc.ndim == 4
    x2 = x[:, :, 0, 0].astype(jnp.float32)      # squeeze(-1).squeeze(-1), H=W=1
    xc2 = xc[:, :, 0, 0].astype(jnp.float32)
    B = x2.shape[0]
    half = packed['half']
    cc = packed['cond_channels']
    P = packed['P']

    tb = 128 if B >= 128 else _round_up(B, 8)
    bp = _round_up(B, tb)

    def pad_rows(a, width):
        return jnp.zeros((bp, P), jnp.float32).at[:B, :width].set(a)

    xa_p = pad_rows(x2[:, :half], half)
    xb_p = pad_rows(x2[:, half:], half)
    xc_p = pad_rows(xc2, cc)

    if not reverse:
        ya, yb, ld = _fused_block_call(xa_p, xb_p, xc_p, packed['w'], packed['b'],
                                       tb=tb, reverse=False)
        x_out = jnp.concatenate([ya[:B, :half], yb[:B, :half]], axis=1)
        return x_out, ld[:B, 0]
    else:
        ya, yb = _fused_block_call(xa_p, xb_p, xc_p, packed['w'], packed['b'],
                                   tb=tb, reverse=True)
        x_out = jnp.concatenate([ya[:B, :half], yb[:B, :half]], axis=1)
        return x_out[:, :, None, None]


# ----------------------------------------------------------------------------
# Pure-JAX reference (mirrors the PyTorch code) for a correctness check.
# ----------------------------------------------------------------------------
def _mlp_ref(h, p):
    hp = jax.lax.Precision.HIGHEST
    w0, b0, w1, b1, w2, b2, w3, b3 = p
    h = jnp.dot(h, w0, precision=hp) + b0; h = jnp.where(h > 0, h, 0.01 * h)
    h = jnp.dot(h, w1, precision=hp) + b1; h = jnp.where(h > 0, h, 0.01 * h)
    h = jnp.dot(h, w2, precision=hp) + b2; h = jnp.where(h > 0, h, 0.01 * h)
    return jnp.dot(h, w3, precision=hp) + b3


def _forward_ref(x, xc, params, mode='normal'):
    x = x[:, :, 0, 0]; xc = xc[:, :, 0, 0]
    half = x.shape[1] // 2
    logdet = jnp.zeros((x.shape[0],), jnp.float32)
    for i in range(2):
        if i % 2 != 0:
            x = jnp.concatenate([x[:, half:], x[:, :half]], axis=1)
        xa, xk = x[:, :half], x[:, half:]
        cond = jnp.concatenate([xa, xc], axis=1) if mode == 'normal' else xc
        scale = _mlp_ref(cond, params['s'][i])
        x_ = xk * jnp.exp(scale) + _mlp_ref(cond, params['t'][i])
        x = jnp.concatenate([xa, x_], axis=1)
        logdet = logdet + jnp.sum(scale, axis=1)
    return x, logdet


# ----------------------------------------------------------------------------
if __name__ == "__main__":
    B, in_channels, cond_channels, hidden_dim = 2, 4, 4, 32

    key = jax.random.PRNGKey(0)
    kx, kxc, kp = jax.random.split(key, 3)
    x = jax.random.normal(kx, (B, in_channels, 1, 1), jnp.float32)
    xc = jax.random.normal(kxc, (B, cond_channels, 1, 1), jnp.float32)

    raw_params = init_block_params(kp, in_channels, cond_channels, hidden_dim,
                                   mode='normal')
    packed = pack_block_params(raw_params, in_channels, cond_channels,
                               hidden_dim, mode='normal')

    out, logdet = conditional_double_vector_coupling_forward(
        x, xc, packed, reverse=False)
    out = jax.block_until_ready(out)
    logdet = jax.block_until_ready(logdet)

    # correctness check against the pure-JAX reference (unpacked weights)
    out_ref, logdet_ref = _forward_ref(x, xc, raw_params)
    assert jnp.allclose(out, out_ref, atol=5e-3, rtol=5e-3), "forward mismatch"
    assert jnp.allclose(logdet, logdet_ref, atol=5e-3, rtol=5e-3), "logdet mismatch"

    # inverse path: reverse(forward(x)) ≈ x
    x_rec = conditional_double_vector_coupling_forward(
        out[:, :, None, None], xc, packed, reverse=True)
    x_rec = jax.block_until_ready(x_rec)
    assert jnp.allclose(x_rec, x, atol=5e-3, rtol=5e-3), "round-trip mismatch"

    print("KERNEL_OK")
</pallas_src>

<mosaic_0001>
module attributes {stable_mosaic.version = 11 : i64} {
  func.func @kernel(%arg0: i32, %arg1: memref<8x128xf32, #tpu.memory_space<vmem>>, %arg2: memref<8x128xf32, #tpu.memory_space<vmem>>, %arg3: memref<8x128xf32, #tpu.memory_space<vmem>>, %arg4: memref<12x128x128xf32, #tpu.memory_space<vmem>>, %arg5: memref<12x1x128xf32, #tpu.memory_space<vmem>>, %arg6: memref<8x128xf32, #tpu.memory_space<vmem>>, %arg7: memref<8x128xf32, #tpu.memory_space<vmem>>, %arg8: memref<8x128xf32, #tpu.memory_space<vmem>>) attributes {dimension_semantics = [#tpu.dimension_semantics<parallel>], iteration_bounds = array<i64: 1>, scalar_prefetch = 0 : i64, scratch_operands = 0 : i64, tpu.core_type = #tpu.core_type<tc>, window_params = [{transform_indices = @transform_0, window_bounds = array<i64: 8, 128>}, {transform_indices = @transform_1, window_bounds = array<i64: 8, 128>}, {transform_indices = @transform_2, window_bounds = array<i64: 8, 128>}, {pipeline_mode = #tpu.pipeline_mode<synchronous>, transform_indices = @transform_3, window_bounds = array<i64: 12, 128, 128>}, {pipeline_mode = #tpu.pipeline_mode<synchronous>, transform_indices = @transform_4, window_bounds = array<i64: 12, 1, 128>}, {transform_indices = @transform_5, window_bounds = array<i64: 8, 128>}, {transform_indices = @transform_6, window_bounds = array<i64: 8, 128>}, {transform_indices = @transform_7, window_bounds = array<i64: 8, 128>}]} {
    %c0 = arith.constant 0 : index
    %c0_0 = arith.constant 0 : index
    %0 = vector.load %arg1[%c0, %c0_0] : memref<8x128xf32, #tpu.memory_space<vmem>>, vector<8x128xf32>
    %c0_1 = arith.constant 0 : index
    %c0_2 = arith.constant 0 : index
    %1 = vector.load %arg2[%c0_1, %c0_2] : memref<8x128xf32, #tpu.memory_space<vmem>>, vector<8x128xf32>
    %c0_3 = arith.constant 0 : index
    %c0_4 = arith.constant 0 : index
    %2 = vector.load %arg3[%c0_3, %c0_4] : memref<8x128xf32, #tpu.memory_space<vmem>>, vector<8x128xf32>
    %c0_5 = arith.constant 0 : index
    %c0_6 = arith.constant 0 : index
    %c0_7 = arith.constant 0 : index
    %3 = vector.load %arg4[%c0_5, %c0_6, %c0_7] : memref<12x128x128xf32, #tpu.memory_space<vmem>>, vector<1x128x128xf32>
    %4 = vector.shape_cast %3 : vector<1x128x128xf32> to vector<128x128xf32>
    %cst = arith.constant dense<0.000000e+00> : vector<8x128xf32>
    %5 = tpu.matmul %0, %4, %cst {dimension_numbers = #tpu.dot_dimension_numbers<[1], [0], [0], [1], [0, 0, 1, 1], [], []>} : vector<8x128xf32>, vector<128x128xf32>, vector<8x128xf32> -> vector<8x128xf32>
    %c0_8 = arith.constant 0 : index
    %c0_9 = arith.constant 0 : index
    %c0_10 = arith.constant 0 : index
    %6 = vector.load %arg5[%c0_8, %c0_9, %c0_10] : memref<12x1x128xf32, #tpu.memory_space<vmem>>, vector<1x1x128xf32>
    %7 = vector.shape_cast %6 : vector<1x1x128xf32> to vector<1x128xf32>
    %8 = vector.broadcast %7 : vector<1x128xf32> to vector<8x128xf32>
    %9 = arith.addf %5, %8 : vector<8x128xf32>
    %c1 = arith.constant 1 : index
    %c0_11 = arith.constant 0 : index
    %c0_12 = arith.constant 0 : index
    %10 = vector.load %arg4[%c1, %c0_11, %c0_12] : memref<12x128x128xf32, #tpu.memory_space<vmem>>, vector<1x128x128xf32>
    %11 = vector.shape_cast %10 : vector<1x128x128xf32> to vector<128x128xf32>
    %cst_13 = arith.constant dense<0.000000e+00> : vector<8x128xf32>
    %12 = tpu.matmul %2, %11, %cst_13 {dimension_numbers = #tpu.dot_dimension_numbers<[1], [0], [0], [1], [0, 0, 1, 1], [], []>} : vector<8x128xf32>, vector<128x128xf32>, vector<8x128xf32> -> vector<8x128xf32>
    %c1_14 = arith.constant 1 : index
    %c0_15 = arith.constant 0 : index
    %c0_16 = arith.constant 0 : index
    %13 = vector.load %arg5[%c1_14, %c0_15, %c0_16] : memref<12x1x128xf32, #tpu.memory_space<vmem>>, vector<1x1x128xf32>
    %14 = vector.shape_cast %13 : vector<1x1x128xf32> to vector<1x128xf32>
    %15 = vector.broadcast %14 : vector<1x128xf32> to vector<8x128xf32>
    %16 = arith.addf %12, %15 : vector<8x128xf32>
    %17 = arith.addf %9, %16 : vector<8x128xf32>
    %cst_17 = arith.constant 0.000000e+00 : f32
    %18 = vector.broadcast %cst_17 : f32 to vector<8x128xf32>
    %19 = arith.cmpf ogt, %17, %18 : vector<8x128xf32>
    %cst_18 = arith.constant 0.00999999977 : f32
    %20 = vector.broadcast %cst_18 : f32 to vector<8x128xf32>
    %21 = arith.mulf %20, %17 : vector<8x128xf32>
    %22 = arith.select %19, %17, %21 : vector<8x128xi1>, vector<8x128xf32>
    %c2 = arith.constant 2 : index
    %c0_19 = arith.constant 0 : index
    %c0_20 = arith.constant 0 : index
    %23 = vector.load %arg4[%c2, %c0_19, %c0_20] : memref<12x128x128xf32, #tpu.memory_space<vmem>>, vector<1x128x128xf32>
    %24 = vector.shape_cast %23 : vector<1x128x128xf32> to vector<128x128xf32>
    %cst_21 = arith.constant dense<0.000000e+00> : vector<8x128xf32>
    %25 = tpu.matmul %22, %24, %cst_21 {dimension_numbers = #tpu.dot_dimension_numbers<[1], [0], [0], [1], [0, 0, 1, 1], [], []>} : vector<8x128xf32>, vector<128x128xf32>, vector<8x128xf32> -> vector<8x128xf32>
    %c2_22 = arith.constant 2 : index
    %c0_23 = arith.constant 0 : index
    %c0_24 = arith.constant 0 : index
    %26 = vector.load %arg5[%c2_22, %c0_23, %c0_24] : memref<12x1x128xf32, #tpu.memory_space<vmem>>, vector<1x1x128xf32>
    %27 = vector.shape_cast %26 : vector<1x1x128xf32> to vector<1x128xf32>
    %28 = vector.broadcast %27 : vector<1x128xf32> to vector<8x128xf32>
    %29 = arith.addf %25, %28 : vector<8x128xf32>
    %cst_25 = arith.constant 0.000000e+00 : f32
    %30 = vector.broadcast %cst_25 : f32 to vector<8x128xf32>
    %31 = arith.cmpf ogt, %29, %30 : vector<8x128xf32>
    %cst_26 = arith.constant 0.00999999977 : f32
    %32 = vector.broadcast %cst_26 : f32 to vector<8x128xf32>
    %33 = arith.mulf %32, %29 : vector<8x128xf32>
    %34 = arith.select %31, %29, %33 : vector<8x128xi1>, vector<8x128xf32>
    %c3 = arith.constant 3 : index
    %c0_27 = arith.constant 0 : index
    %c0_28 = arith.constant 0 : index
    %35 = vector.load %arg4[%c3, %c0_27, %c0_28] : memref<12x128x128xf32, #tpu.memory_space<vmem>>, vector<1x128x128xf32>
    %36 = vector.shape_cast %35 : vector<1x128x128xf32> to vector<128x128xf32>
    %cst_29 = arith.constant dense<0.000000e+00> : vector<8x128xf32>
    %37 = tpu.matmul %34, %36, %cst_29 {dimension_numbers = #tpu.dot_dimension_numbers<[1], [0], [0], [1], [0, 0, 1, 1], [], []>} : vector<8x128xf32>, vector<128x128xf32>, vector<8x128xf32> -> vector<8x128xf32>
    %c3_30 = arith.constant 3 : index
    %c0_31 = arith.constant 0 : index
    %c0_32 = arith.constant 0 : index
    %38 = vector.load %arg5[%c3_30, %c0_31, %c0_32] : memref<12x1x128xf32, #tpu.memory_space<vmem>>, vector<1x1x128xf32>
    %39 = vector.shape_cast %38 : vector<1x1x128xf32> to vector<1x128xf32>
    %40 = vector.broadcast %39 : vector<1x128xf32> to vector<8x128xf32>
    %41 = arith.addf %37, %40 : vector<8x128xf32>
    %cst_33 = arith.constant 0.000000e+00 : f32
    %42 = vector.broadcast %cst_33 : f32 to vector<8x128xf32>
    %43 = arith.cmpf ogt, %41, %42 : vector<8x128xf32>
    %cst_34 = arith.constant 0.00999999977 : f32
    %44 = vector.broadcast %cst_34 : f32 to vector<8x128xf32>
    %45 = arith.mulf %44, %41 : vector<8x128xf32>
    %46 = arith.select %43, %41, %45 : vector<8x128xi1>, vector<8x128xf32>
    %c4 = arith.constant 4 : index
    %c0_35 = arith.constant 0 : index
    %c0_36 = arith.constant 0 : index
    %47 = vector.load %arg4[%c4, %c0_35, %c0_36] : memref<12x128x128xf32, #tpu.memory_space<vmem>>, vector<1x128x128xf32>
    %48 = vector.shape_cast %47 : vector<1x128x128xf32> to vector<128x128xf32>
    %cst_37 = arith.constant dense<0.000000e+00> : vector<8x128xf32>
    %49 = tpu.matmul %46, %48, %cst_37 {dimension_numbers = #tpu.dot_dimension_numbers<[1], [0], [0], [1], [0, 0, 1, 1], [], []>} : vector<8x128xf32>, vector<128x128xf32>, vector<8x128xf32> -> vector<8x128xf32>
    %c4_38 = arith.constant 4 : index
    %c0_39 = arith.constant 0 : index
    %c0_40 = arith.constant 0 : index
    %50 = vector.load %arg5[%c4_38, %c0_39, %c0_40] : memref<12x1x128xf32, #tpu.memory_space<vmem>>, vector<1x1x128xf32>
    %51 = vector.shape_cast %50 : vector<1x1x128xf32> to vector<1x128xf32>
    %52 = vector.broadcast %51 : vector<1x128xf32> to vector<8x128xf32>
    %53 = arith.addf %49, %52 : vector<8x128xf32>
    %c5 = arith.constant 5 : index
    %c0_41 = arith.constant 0 : index
    %c0_42 = arith.constant 0 : index
    %54 = vector.load %arg4[%c5, %c0_41, %c0_42] : memref<12x128x128xf32, #tpu.memory_space<vmem>>, vector<1x128x128xf32>
    %55 = vector.shape_cast %54 : vector<1x128x128xf32> to vector<128x128xf32>
    %cst_43 = arith.constant dense<0.000000e+00> : vector<8x128xf32>
    %56 = tpu.matmul %46, %55, %cst_43 {dimension_numbers = #tpu.dot_dimension_numbers<[1], [0], [0], [1], [0, 0, 1, 1], [], []>} : vector<8x128xf32>, vector<128x128xf32>, vector<8x128xf32> -> vector<8x128xf32>
    %c5_44 = arith.constant 5 : index
    %c0_45 = arith.constant 0 : index
    %c0_46 = arith.constant 0 : index
    %57 = vector.load %arg5[%c5_44, %c0_45, %c0_46] : memref<12x1x128xf32, #tpu.memory_space<vmem>>, vector<1x1x128xf32>
    %58 = vector.shape_cast %57 : vector<1x1x128xf32> to vector<1x128xf32>
    %59 = vector.broadcast %58 : vector<1x128xf32> to vector<8x128xf32>
    %60 = arith.addf %56, %59 : vector<8x128xf32>
    %61 = math.exp %53 : vector<8x128xf32>
    %62 = arith.mulf %1, %61 : vector<8x128xf32>
    %63 = arith.addf %62, %60 : vector<8x128xf32>
    %c6 = arith.constant 6 : index
    %c0_47 = arith.constant 0 : index
    %c0_48 = arith.constant 0 : index
    %64 = vector.load %arg4[%c6, %c0_47, %c0_48] : memref<12x128x128xf32, #tpu.memory_space<vmem>>, vector<1x128x128xf32>
    %65 = vector.shape_cast %64 : vector<1x128x128xf32> to vector<128x128xf32>
    %cst_49 = arith.constant dense<0.000000e+00> : vector<8x128xf32>
    %66 = tpu.matmul %63, %65, %cst_49 {dimension_numbers = #tpu.dot_dimension_numbers<[1], [0], [0], [1], [0, 0, 1, 1], [], []>} : vector<8x128xf32>, vector<128x128xf32>, vector<8x128xf32> -> vector<8x128xf32>
    %c6_50 = arith.constant 6 : index
    %c0_51 = arith.constant 0 : index
    %c0_52 = arith.constant 0 : index
    %67 = vector.load %arg5[%c6_50, %c0_51, %c0_52] : memref<12x1x128xf32, #tpu.memory_space<vmem>>, vector<1x1x128xf32>
    %68 = vector.shape_cast %67 : vector<1x1x128xf32> to vector<1x128xf32>
    %69 = vector.broadcast %68 : vector<1x128xf32> to vector<8x128xf32>
    %70 = arith.addf %66, %69 : vector<8x128xf32>
    %c7 = arith.constant 7 : index
    %c0_53 = arith.constant 0 : index
    %c0_54 = arith.constant 0 : index
    %71 = vector.load %arg4[%c7, %c0_53, %c0_54] : memref<12x128x128xf32, #tpu.memory_space<vmem>>, vector<1x128x128xf32>
    %72 = vector.shape_cast %71 : vector<1x128x128xf32> to vector<128x128xf32>
    %cst_55 = arith.constant dense<0.000000e+00> : vector<8x128xf32>
    %73 = tpu.matmul %2, %72, %cst_55 {dimension_numbers = #tpu.dot_dimension_numbers<[1], [0], [0], [1], [0, 0, 1, 1], [], []>} : vector<8x128xf32>, vector<128x128xf32>, vector<8x128xf32> -> vector<8x128xf32>
    %c7_56 = arith.constant 7 : index
    %c0_57 = arith.constant 0 : index
    %c0_58 = arith.constant 0 : index
    %74 = vector.load %arg5[%c7_56, %c0_57, %c0_58] : memref<12x1x128xf32, #tpu.memory_space<vmem>>, vector<1x1x128xf32>
    %75 = vector.shape_cast %74 : vector<1x1x128xf32> to vector<1x128xf32>
    %76 = vector.broadcast %75 : vector<1x128xf32> to vector<8x128xf32>
    %77 = arith.addf %73, %76 : vector<8x128xf32>
    %78 = arith.addf %70, %77 : vector<8x128xf32>
    %cst_59 = arith.constant 0.000000e+00 : f32
    %79 = vector.broadcast %cst_59 : f32 to vector<8x128xf32>
    %80 = arith.cmpf ogt, %78, %79 : vector<8x128xf32>
    %cst_60 = arith.constant 0.00999999977 : f32
    %81 = vector.broadcast %cst_60 : f32 to vector<8x128xf32>
    %82 = arith.mulf %81, %78 : vector<8x128xf32>
    %83 = arith.select %80, %78, %82 : vector<8x128xi1>, vector<8x128xf32>
    %c8 = arith.constant 8 : index
    %c0_61 = arith.constant 0 : index
    %c0_62 = arith.constant 0 : index
    %84 = vector.load %arg4[%c8, %c0_61, %c0_62] : memref<12x128x128xf32, #tpu.memory_space<vmem>>, vector<1x128x128xf32>
    %85 = vector.shape_cast %84 : vector<1x128x128xf32> to vector<128x128xf32>
    %cst_63 = arith.constant dense<0.000000e+00> : vector<8x128xf32>
    %86 = tpu.matmul %83, %85, %cst_63 {dimension_numbers = #tpu.dot_dimension_numbers<[1], [0], [0], [1], [0, 0, 1, 1], [], []>} : vector<8x128xf32>, vector<128x128xf32>, vector<8x128xf32> -> vector<8x128xf32>
    %c8_64 = arith.constant 8 : index
    %c0_65 = arith.constant 0 : index
    %c0_66 = arith.constant 0 : index
    %87 = vector.load %arg5[%c8_64, %c0_65, %c0_66] : memref<12x1x128xf32, #tpu.memory_space<vmem>>, vector<1x1x128xf32>
    %88 = vector.shape_cast %87 : vector<1x1x128xf32> to vector<1x128xf32>
    %89 = vector.broadcast %88 : vector<1x128xf32> to vector<8x128xf32>
    %90 = arith.addf %86, %89 : vector<8x128xf32>
    %cst_67 = arith.constant 0.000000e+00 : f32
    %91 = vector.broadcast %cst_67 : f32 to vector<8x128xf32>
    %92 = arith.cmpf ogt, %90, %91 : vector<8x128xf32>
    %cst_68 = arith.constant 0.00999999977 : f32
    %93 = vector.broadcast %cst_68 : f32 to vector<8x128xf32>
    %94 = arith.mulf %93, %90 : vector<8x128xf32>
    %95 = arith.select %92, %90, %94 : vector<8x128xi1>, vector<8x128xf32>
    %c9 = arith.constant 9 : index
    %c0_69 = arith.constant 0 : index
    %c0_70 = arith.constant 0 : index
    %96 = vector.load %arg4[%c9, %c0_69, %c0_70] : memref<12x128x128xf32, #tpu.memory_space<vmem>>, vector<1x128x128xf32>
    %97 = vector.shape_cast %96 : vector<1x128x128xf32> to vector<128x128xf32>
    %cst_71 = arith.constant dense<0.000000e+00> : vector<8x128xf32>
    %98 = tpu.matmul %95, %97, %cst_71 {dimension_numbers = #tpu.dot_dimension_numbers<[1], [0], [0], [1], [0, 0, 1, 1], [], []>} : vector<8x128xf32>, vector<128x128xf32>, vector<8x128xf32> -> vector<8x128xf32>
    %c9_72 = arith.constant 9 : index
    %c0_73 = arith.constant 0 : index
    %c0_74 = arith.constant 0 : index
    %99 = vector.load %arg5[%c9_72, %c0_73, %c0_74] : memref<12x1x128xf32, #tpu.memory_space<vmem>>, vector<1x1x128xf32>
    %100 = vector.shape_cast %99 : vector<1x1x128xf32> to vector<1x128xf32>
    %101 = vector.broadcast %100 : vector<1x128xf32> to vector<8x128xf32>
    %102 = arith.addf %98, %101 : vector<8x128xf32>
    %cst_75 = arith.constant 0.000000e+00 : f32
    %103 = vector.broadcast %cst_75 : f32 to vector<8x128xf32>
    %104 = arith.cmpf ogt, %102, %103 : vector<8x128xf32>
    %cst_76 = arith.constant 0.00999999977 : f32
    %105 = vector.broadcast %cst_76 : f32 to vector<8x128xf32>
    %106 = arith.mulf %105, %102 : vector<8x128xf32>
    %107 = arith.select %104, %102, %106 : vector<8x128xi1>, vector<8x128xf32>
    %c10 = arith.constant 10 : index
    %c0_77 = arith.constant 0 : index
    %c0_78 = arith.constant 0 : index
    %108 = vector.load %arg4[%c10, %c0_77, %c0_78] : memref<12x128x128xf32, #tpu.memory_space<vmem>>, vector<1x128x128xf32>
    %109 = vector.shape_cast %108 : vector<1x128x128xf32> to vector<128x128xf32>
    %cst_79 = arith.constant dense<0.000000e+00> : vector<8x128xf32>
    %110 = tpu.matmul %107, %109, %cst_79 {dimension_numbers = #tpu.dot_dimension_numbers<[1], [0], [0], [1], [0, 0, 1, 1], [], []>} : vector<8x128xf32>, vector<128x128xf32>, vector<8x128xf32> -> vector<8x128xf32>
    %c10_80 = arith.constant 10 : index
    %c0_81 = arith.constant 0 : index
    %c0_82 = arith.constant 0 : index
    %111 = vector.load %arg5[%c10_80, %c0_81, %c0_82] : memref<12x1x128xf32, #tpu.memory_space<vmem>>, vector<1x1x128xf32>
    %112 = vector.shape_cast %111 : vector<1x1x128xf32> to vector<1x128xf32>
    %113 = vector.broadcast %112 : vector<1x128xf32> to vector<8x128xf32>
    %114 = arith.addf %110, %113 : vector<8x128xf32>
    %c11 = arith.constant 11 : index
    %c0_83 = arith.constant 0 : index
    %c0_84 = arith.constant 0 : index
    %115 = vector.load %arg4[%c11, %c0_83, %c0_84] : memref<12x128x128xf32, #tpu.memory_space<vmem>>, vector<1x128x128xf32>
    %116 = vector.shape_cast %115 : vector<1x128x128xf32> to vector<128x128xf32>
    %cst_85 = arith.constant dense<0.000000e+00> : vector<8x128xf32>
    %117 = tpu.matmul %107, %116, %cst_85 {dimension_numbers = #tpu.dot_dimension_numbers<[1], [0], [0], [1], [0, 0, 1, 1], [], []>} : vector<8x128xf32>, vector<128x128xf32>, vector<8x128xf32> -> vector<8x128xf32>
    %c11_86 = arith.constant 11 : index
    %c0_87 = arith.constant 0 : index
    %c0_88 = arith.constant 0 : index
    %118 = vector.load %arg5[%c11_86, %c0_87, %c0_88] : memref<12x1x128xf32, #tpu.memory_space<vmem>>, vector<1x1x128xf32>
    %119 = vector.shape_cast %118 : vector<1x1x128xf32> to vector<1x128xf32>
    %120 = vector.broadcast %119 : vector<1x128xf32> to vector<8x128xf32>
    %121 = arith.addf %117, %120 : vector<8x128xf32>
    %122 = math.exp %114 : vector<8x128xf32>
    %123 = arith.mulf %0, %122 : vector<8x128xf32>
    %124 = arith.addf %123, %121 : vector<8x128xf32>
    %c0_89 = arith.constant 0 : index
    %c0_90 = arith.constant 0 : index
    %125 = vector.load %arg6[%c0_89, %c0_90] : memref<8x128xf32, #tpu.memory_space<vmem>>, vector<8x128xf32>
    tpu.vector_store %arg6[%c0_89, %c0_90], %63 {strides = array<i32>} : memref<8x128xf32, #tpu.memory_space<vmem>>, vector<8x128xf32>,
    %c0_91 = arith.constant 0 : index
    %c0_92 = arith.constant 0 : index
    %126 = vector.load %arg7[%c0_91, %c0_92] : memref<8x128xf32, #tpu.memory_space<vmem>>, vector<8x128xf32>
    tpu.vector_store %arg7[%c0_91, %c0_92], %124 {strides = array<i32>} : memref<8x128xf32, #tpu.memory_space<vmem>>, vector<8x128xf32>,
    %127 = arith.addf %53, %114 : vector<8x128xf32>
    %cst_93 = arith.constant dense<0.000000e+00> : vector<8xf32>
    %128 = vector.multi_reduction <add>, %127, %cst_93 [1] : vector<8x128xf32> to vector<8xf32>
    %129 = vector.shape_cast %128 : vector<8xf32> to vector<8x1xf32>
    %130 = vector.shape_cast %129 : vector<8x1xf32> to vector<8x1xf32>
    %131 = vector.broadcast %130 : vector<8x1xf32> to vector<8x128xf32>
    %c0_94 = arith.constant 0 : index
    %c0_95 = arith.constant 0 : index
    %132 = vector.load %arg8[%c0_94, %c0_95] : memref<8x128xf32, #tpu.memory_space<vmem>>, vector<8x128xf32>
    tpu.vector_store %arg8[%c0_94, %c0_95], %131 {strides = array<i32>} : memref<8x128xf32, #tpu.memory_space<vmem>>, vector<8x128xf32>,
    return
  }
  func.func @transform_0(%arg0: i32) -> (i32, i32) {
    %c0_i32 = arith.constant 0 : i32
    %c0_i32_0 = arith.constant 0 : i32
    return %arg0, %c0_i32 : i32, i32
  }
  func.func @transform_1(%arg0: i32) -> (i32, i32) {
    %c0_i32 = arith.constant 0 : i32
    %c0_i32_0 = arith.constant 0 : i32
    return %arg0, %c0_i32 : i32, i32
  }
  func.func @transform_2(%arg0: i32) -> (i32, i32) {
    %c0_i32 = arith.constant 0 : i32
    %c0_i32_0 = arith.constant 0 : i32
    return %arg0, %c0_i32 : i32, i32
  }
  func.func @transform_3(%arg0: i32) -> (i32, i32, i32) {
    %c0_i32 = arith.constant 0 : i32
    %c0_i32_0 = arith.constant 0 : i32
    %c0_i32_1 = arith.constant 0 : i32
    %c0_i32_2 = arith.constant 0 : i32
    return %c0_i32, %c0_i32_0, %c0_i32_1 : i32, i32, i32
  }
  func.func @transform_4(%arg0: i32) -> (i32, i32, i32) {
    %c0_i32 = arith.constant 0 : i32
    %c0_i32_0 = arith.constant 0 : i32
    %c0_i32_1 = arith.constant 0 : i32
    %c0_i32_2 = arith.constant 0 : i32
    return %c0_i32, %c0_i32_0, %c0_i32_1 : i32, i32, i32
  }
  func.func @transform_5(%arg0: i32) -> (i32, i32) {
    %c0_i32 = arith.constant 0 : i32
    %c0_i32_0 = arith.constant 0 : i32
    return %arg0, %c0_i32 : i32, i32
  }
  func.func @transform_6(%arg0: i32) -> (i32, i32) {
    %c0_i32 = arith.constant 0 : i32
    %c0_i32_0 = arith.constant 0 : i32
    return %arg0, %c0_i32 : i32, i32
  }
  func.func @transform_7(%arg0: i32) -> (i32, i32) {
    %c0_i32 = arith.constant 0 : i32
    %c0_i32_0 = arith.constant 0 : i32
    return %arg0, %c0_i32 : i32, i32
  }
}

</mosaic_0001>

<llo_original>
// kernel: tpu_custom_call.1
$region0: #{tpu_custom_call.1}
  #allocation0 [shape = 'u32[]', space=smem, size = 0x4, offset = 0x4, fixed_abs, tag = 'smem constant byte address 0x4 - core index']
  #allocation1 [shape = 'u32[144,128]{1,0:T(1,128)}', space=vmem, size = 0x12000, scoped, tag = 'internal scratch']
  %s0 = inlined_call_operand.hbm [shape: f32[8,128], index: 0, kind: input, shape index: {}]
  %s1 = inlined_call_operand.hbm [shape: f32[8,128], index: 1, kind: input, shape index: {}]
  %s2 = inlined_call_operand.hbm [shape: f32[8,128], index: 2, kind: input, shape index: {}]
  %s3 = inlined_call_operand.hbm [shape: f32[12,128,128], index: 3, kind: input, shape index: {}]
  %s4 = inlined_call_operand.vmem [shape: f32[12,1,128], index: 4, kind: input, shape index: {}]
  %s5 = inlined_call_operand.hbm [shape: f32[8,128], index: 5, kind: output, shape index: {0}]
  %s6 = inlined_call_operand.hbm [shape: f32[8,128], index: 6, kind: output, shape index: {1}]
  %s7 = inlined_call_operand.hbm [shape: f32[8,128], index: 7, kind: output, shape index: {2}]
  %8 = xla_tuple %s5, %s6, %s7
  %s9 = sld [smem:[#allocation0]]
  $region62: #{tpu_custom_call.1} parent=0
    _
  %s11 = ssub.s32 1, %s9
  %s12 = scalar_select 0, %s11, %s9
  $region1: #{tpu_custom_call.1} parent=0
    #allocation2 [shape = 'u8[4096]{0}', space=vmem, size = 0x1000, scoped, tag = 'input window, operand 0, single buffered']
    #allocation3 [shape = 's32[1]{0}', space=sflag, size = 0x4, scoped, tag = 'scoped memory for tpu_custom_call.1']
    #allocation4 [shape = 's32[1]{0}', space=sflag, size = 0x4, scoped, tag = 'scoped memory for tpu_custom_call.1']
    #allocation5 [shape = 'u8[4096]{0}', space=vmem, size = 0x1000, scoped, tag = 'input window, operand 1, single buffered']
    #allocation6 [shape = 's32[1]{0}', space=sflag, size = 0x4, scoped, tag = 'scoped memory for tpu_custom_call.1']
    #allocation7 [shape = 'u8[4096]{0}', space=vmem, size = 0x1000, scoped, tag = 'input window, operand 2, single buffered']
    #allocation8 [shape = 'u8[786432]{0}', space=vmem, size = 0xc0000, scoped, tag = 'input window, operand 3, single buffered']
    #allocation9 [shape = 's32[1]{0}', space=sflag, size = 0x4, scoped, tag = 'scoped memory for tpu_custom_call.1']
    #allocation10 [shape = 'u8[4096]{0}', space=vmem, size = 0x1000, scoped, tag = 'output window, operand 0, single buffered']
    #allocation11 [shape = 'u8[4096]{0}', space=vmem, size = 0x1000, scoped, tag = 'output window, operand 1, single buffered']
    #allocation12 [shape = 's32[1]{0}', space=sflag, size = 0x4, scoped, tag = 'scoped memory for tpu_custom_call.1']
    #allocation13 [shape = 'u8[4096]{0}', space=vmem, size = 0x1000, scoped, tag = 'output window, operand 2, single buffered']
    %13 = vsyncpa [#allocation3], 0
    %14 = vsyncpa [#allocation6], 0
    %15 = vsyncpa [#allocation9], 0
    %16 = vsyncpa [#allocation4], 0
    %17 = vsyncpa [#allocation12], 0
    // Predicated region
    $region2: #{tpu_custom_call.1} parent=1 // pred_check
      _
    $region3: #{tpu_custom_call.1} parent=1 // pred_check_branch
      %19 = sbr.rel (0) target = $region5
    $region4: #{tpu_custom_call.1} parent=1 // pred_region
      %s21 = ssub.s32 128, 128
      %22 = vsyncadd [#allocation3], %s21
      %s24 = sshll.u32 [#allocation2], 4
      %s25 = int_to_ptr.vmem [resolvable:$true] %s24
      %27 = dma.hbm_to_vmem [thread:$0]  %s0, 128, %s25, [#allocation3]
    $region5: #{tpu_custom_call.1} parent=1 // pred_fallthru
      _
    // Predicated region
    $region6: #{tpu_custom_call.1} parent=1 // pred_check
      _
    $region7: #{tpu_custom_call.1} parent=1 // pred_check_branch
      %29 = sbr.rel (0) target = $region9
    $region8: #{tpu_custom_call.1} parent=1 // pred_region
      %s31 = ssub.s32 128, 128
      %32 = vsyncadd [#allocation6], %s31
      %s34 = sshll.u32 [#allocation5], 4
      %s35 = int_to_ptr.vmem [resolvable:$true] %s34
      %37 = dma.hbm_to_vmem [thread:$0]  %s1, 128, %s35, [#allocation6]
    $region9: #{tpu_custom_call.1} parent=1 // pred_fallthru
      _
    // Predicated region
    $region10: #{tpu_custom_call.1} parent=1 // pred_check
      _
    $region11: #{tpu_custom_call.1} parent=1 // pred_check_branch
      %39 = sbr.rel (0) target = $region13
    $region12: #{tpu_custom_call.1} parent=1 // pred_region
      %s41 = ssub.s32 128, 128
      %42 = vsyncadd [#allocation6], %s41
      %s44 = sshll.u32 [#allocation7], 4
      %s45 = int_to_ptr.vmem [resolvable:$true] %s44
      %47 = dma.hbm_to_vmem [thread:$0]  %s2, 128, %s45, [#allocation6]
    $region13: #{tpu_custom_call.1} parent=1 // pred_fallthru
      _
    // Predicated region
    $region14: #{tpu_custom_call.1} parent=1 // pred_check
      _
    $region15: #{tpu_custom_call.1} parent=1 // pred_check_branch
      %49 = sbr.rel (0) target = $region17
    $region16: #{tpu_custom_call.1} parent=1 // pred_region
      %s51 = ssub.s32 24576, 24576
      %52 = vsyncadd [#allocation9], %s51
      %s53 = sshll.u32 [#allocation8], 4
      %s54 = int_to_ptr.vmem [resolvable:$true] %s53
      %59 = dma.hbm_to_vmem [thread:$0]  %s3, 24576, %s54, [#allocation9], 128, 128, 8
    $region17: #{tpu_custom_call.1} parent=1 // pred_fallthru
      _
    // Predicated region
    $region18: #{tpu_custom_call.1} parent=1 // pred_check
      _
    $region19: #{tpu_custom_call.1} parent=1 // pred_check_branch
      %61 = sbr.rel (0) target = $region21
    $region20: #{tpu_custom_call.1} parent=1 // pred_region
      _
    $region21: #{tpu_custom_call.1} parent=1 // pred_fallthru
      _
    // Predicated region
    $region22: #{tpu_custom_call.1} parent=1 // pred_check
      _
    $region23: #{tpu_custom_call.1} parent=1 // pred_check_branch
      %63 = sbr.rel (0) target = $region25
    $region24: #{tpu_custom_call.1} parent=1 // pred_region
      %64 = dma.done [#allocation3], 128
    $region25: #{tpu_custom_call.1} parent=1 // pred_fallthru
      _
    // Predicated region
    $region26: #{tpu_custom_call.1} parent=1 // pred_check
      _
    $region27: #{tpu_custom_call.1} parent=1 // pred_check_branch
      %66 = sbr.rel (0) target = $region29
    $region28: #{tpu_custom_call.1} parent=1 // pred_region
      %67 = dma.done [#allocation6], 128
    $region29: #{tpu_custom_call.1} parent=1 // pred_fallthru
      _
    // Predicated region
    $region30: #{tpu_custom_call.1} parent=1 // pred_check
      _
    $region31: #{tpu_custom_call.1} parent=1 // pred_check_branch
      %69 = sbr.rel (0) target = $region33
    $region32: #{tpu_custom_call.1} parent=1 // pred_region
      %70 = dma.done [#allocation6], 128
    $region33: #{tpu_custom_call.1} parent=1 // pred_fallthru
      _
    // Predicated region
    $region34: #{tpu_custom_call.1} parent=1 // pred_check
      _
    $region35: #{tpu_custom_call.1} parent=1 // pred_check_branch
      %72 = sbr.rel (0) target = $region37
    $region36: #{tpu_custom_call.1} parent=1 // pred_region
      %73 = dma.done [#allocation9], 24576
    $region37: #{tpu_custom_call.1} parent=1 // pred_fallthru
      _
    %v74 = vld [vmem:[#allocation2] sm:$0xff]
    %v75 = vld [vmem:[#allocation5] sm:$0xff]
    %v76 = vld [vmem:[#allocation7] sm:$0xff]
    %v77 = vld [vmem:[#allocation8] sm:$0xff]
    %v78 = vld [vmem:[#allocation8 + $0x8] sm:$0xff]
    %v79 = vld [vmem:[#allocation8 + $0x10] sm:$0xff]
    %v80 = vld [vmem:[#allocation8 + $0x18] sm:$0xff]
    %v81 = vld [vmem:[#allocation8 + $0x20] sm:$0xff]
    %v82 = vld [vmem:[#allocation8 + $0x28] sm:$0xff]
    %v83 = vld [vmem:[#allocation8 + $0x30] sm:$0xff]
    %v84 = vld [vmem:[#allocation8 + $0x38] sm:$0xff]
    %v85 = vld [vmem:[#allocation8 + $0x40] sm:$0xff]
    %v86 = vld [vmem:[#allocation8 + $0x48] sm:$0xff]
    %v87 = vld [vmem:[#allocation8 + $0x50] sm:$0xff]
    %v88 = vld [vmem:[#allocation8 + $0x58] sm:$0xff]
    %v89 = vld [vmem:[#allocation8 + $0x60] sm:$0xff]
    %v90 = vld [vmem:[#allocation8 + $0x68] sm:$0xff]
    %v91 = vld [vmem:[#allocation8 + $0x70] sm:$0xff]
    %v92 = vld [vmem:[#allocation8 + $0x78] sm:$0xff]
    %v93 = vld [vmem:[%s4] sm:$0x1]
    %v95 = vlaneseq
    %v96 = vshrl.u32 %v95, 7
    %v97 = vsub.s32 0, %v96
    %v98 = vrot.slane %v93, %v97
    %100 = vmatprep.subr.mxu0 0.0
    %101 = vmatpush1.msra.mxu0 %v77
    %102 = vmatprep.subr.mxu0 0.0
    %103 = vmatpush1.msra.mxu0 %v78
    %104 = vmatprep.subr.mxu0 0.0
    %105 = vmatpush1.msra.mxu0 %v79
    %106 = vmatprep.subr.mxu0 0.0
    %107 = vmatpush1.msra.mxu0 %v80
    %108 = vmatprep.subr.mxu0 0.0
    %109 = vmatpush1.msra.mxu0 %v81
    %110 = vmatprep.subr.mxu0 0.0
    %111 = vmatpush1.msra.mxu0 %v82
    %112 = vmatprep.subr.mxu0 0.0
    %113 = vmatpush1.msra.mxu0 %v83
    %114 = vmatprep.subr.mxu0 0.0
    %115 = vmatpush1.msra.mxu0 %v84
    %116 = vmatprep.subr.mxu0 0.0
    %117 = vmatpush1.msra.mxu0 %v85
    %118 = vmatprep.subr.mxu0 0.0
    %119 = vmatpush1.msra.mxu0 %v86
    %120 = vmatprep.subr.mxu0 0.0
    %121 = vmatpush1.msra.mxu0 %v87
    %122 = vmatprep.subr.mxu0 0.0
    %123 = vmatpush1.msra.mxu0 %v88
    %124 = vmatprep.subr.mxu0 0.0
    %125 = vmatpush1.msra.mxu0 %v89
    %126 = vmatprep.subr.mxu0 0.0
    %127 = vmatpush1.msra.mxu0 %v90
    %128 = vmatprep.subr.mxu0 0.0
    %129 = vmatpush1.msra.mxu0 %v91
    %130 = vmatprep.subr.mxu0 0.0
    %131 = vmatpush1.msra.mxu0 %v92
    %132 = vmatprep.subr.mxu0 0.0
    %133 = vmatpush1.msra.mxu0 0.0
    %134 = vmatprep.subr.mxu0 0.0
    %135 = vmatpush1.msra.mxu0 0.0
    %136 = vmatprep.subr.mxu0 0.0
    %137 = vmatpush1.msra.mxu0 0.0
    %138 = vmatprep.subr.mxu0 0.0
    %139 = vmatpush1.msra.mxu0 0.0
    %140 = vmatprep.subr.mxu0 0.0
    %141 = vmatpush1.msra.mxu0 0.0
    %142 = vmatprep.subr.mxu0 0.0
    %143 = vmatpush1.msra.mxu0 0.0
    %144 = vmatprep.subr.mxu0 0.0
    %145 = vmatpush1.msra.mxu0 0.0
    %146 = vmatprep.subr.mxu0 0.0
    %147 = vmatpush1.msra.mxu0 0.0
    %148 = vmatprep.subr.mxu0 0.0
    %149 = vmatpush1.msra.mxu0 0.0
    %150 = vmatprep.subr.mxu0 0.0
    %151 = vmatpush1.msra.mxu0 0.0
    %152 = vmatprep.subr.mxu0 0.0
    %153 = vmatpush1.msra.mxu0 0.0
    %154 = vmatprep.subr.mxu0 0.0
    %155 = vmatpush1.msra.mxu0 0.0
    %156 = vmatprep.subr.mxu0 0.0
    %157 = vmatpush1.msra.mxu0 0.0
    %158 = vmatprep.subr.mxu0 0.0
    %159 = vmatpush1.msra.mxu0 0.0
    %160 = vmatprep.subr.mxu0 0.0
    %161 = vmatpush1.msra.mxu0 0.0
    %162 = vmatprep.subr.mxu0 0.0
    %163 = vmatpush1.msra.mxu0 0.0
    %164 = vmatprep.mubr.f32.mxu0 0.0
    %165 = vmatmul.mubr.f32.gmra.mrb[0].mxu0 %v74
    %v166 = vpop.f32.mrb[0].mxu0
    %v167 = vadd.f32 %v98, %v166
    %v168 = vpop.f32.mrb[0].mxu0
    %169 = vdwg.mxu0
    %s170 = scalar_lea.vmem [#allocation8], 128
    %v171 = vld [vmem:[%s170] sm:$0xff]
    %v172 = vld [vmem:[%s170 + $0x8] sm:$0xff]
    %v173 = vld [vmem:[%s170 + $0x10] sm:$0xff]
    %v174 = vld [vmem:[%s170 + $0x18] sm:$0xff]
    %v175 = vld [vmem:[%s170 + $0x20] sm:$0xff]
    %v176 = vld [vmem:[%s170 + $0x28] sm:$0xff]
    %v177 = vld [vmem:[%s170 + $0x30] sm:$0xff]
    %v178 = vld [vmem:[%s170 + $0x38] sm:$0xff]
    %v179 = vld [vmem:[%s170 + $0x40] sm:$0xff]
    %v180 = vld [vmem:[%s170 + $0x48] sm:$0xff]
    %v181 = vld [vmem:[%s170 + $0x50] sm:$0xff]
    %v182 = vld [vmem:[%s170 + $0x58] sm:$0xff]
    %v183 = vld [vmem:[%s170 + $0x60] sm:$0xff]
    %v184 = vld [vmem:[%s170 + $0x68] sm:$0xff]
    %v185 = vld [vmem:[%s170 + $0x70] sm:$0xff]
    %v186 = vld [vmem:[%s170 + $0x78] sm:$0xff]
    %s187 = scalar_lea.vmem %s4, 1
    %v188 = vld [vmem:[%s187] sm:$0x1]
    %v190 = vlaneseq
    %v191 = vshrl.u32 %v190, 7
    %v192 = vsub.s32 0, %v191
    %v193 = vrot.slane %v188, %v192
    %195 = vmatprep.subr.mxu0 0.0
    %196 = vmatpush1.msra.mxu0 %v171
    %197 = vmatprep.subr.mxu0 0.0
    %198 = vmatpush1.msra.mxu0 %v172
    %199 = vmatprep.subr.mxu0 0.0
    %200 = vmatpush1.msra.mxu0 %v173
    %201 = vmatprep.subr.mxu0 0.0
    %202 = vmatpush1.msra.mxu0 %v174
    %203 = vmatprep.subr.mxu0 0.0
    %204 = vmatpush1.msra.mxu0 %v175
    %205 = vmatprep.subr.mxu0 0.0
    %206 = vmatpush1.msra.mxu0 %v176
    %207 = vmatprep.subr.mxu0 0.0
    %208 = vmatpush1.msra.mxu0 %v177
    %209 = vmatprep.subr.mxu0 0.0
    %210 = vmatpush1.msra.mxu0 %v178
    %211 = vmatprep.subr.mxu0 0.0
    %212 = vmatpush1.msra.mxu0 %v179
    %213 = vmatprep.subr.mxu0 0.0
    %214 = vmatpush1.msra.mxu0 %v180
    %215 = vmatprep.subr.mxu0 0.0
    %216 = vmatpush1.msra.mxu0 %v181
    %217 = vmatprep.subr.mxu0 0.0
    %218 = vmatpush1.msra.mxu0 %v182
    %219 = vmatprep.subr.mxu0 0.0
    %220 = vmatpush1.msra.mxu0 %v183
    %221 = vmatprep.subr.mxu0 0.0
    %222 = vmatpush1.msra.mxu0 %v184
    %223 = vmatprep.subr.mxu0 0.0
    %224 = vmatpush1.msra.mxu0 %v185
    %225 = vmatprep.subr.mxu0 0.0
    %226 = vmatpush1.msra.mxu0 %v186
    %227 = vmatprep.subr.mxu0 0.0
    %228 = vmatpush1.msra.mxu0 0.0
    %229 = vmatprep.subr.mxu0 0.0
    %230 = vmatpush1.msra.mxu0 0.0
    %231 = vmatprep.subr.mxu0 0.0
    %232 = vmatpush1.msra.mxu0 0.0
    %233 = vmatprep.subr.mxu0 0.0
    %234 = vmatpush1.msra.mxu0 0.0
    %235 = vmatprep.subr.mxu0 0.0
    %236 = vmatpush1.msra.mxu0 0.0
    %237 = vmatprep.subr.mxu0 0.0
    %238 = vmatpush1.msra.mxu0 0.0
    %239 = vmatprep.subr.mxu0 0.0
    %240 = vmatpush1.msra.mxu0 0.0
    %241 = vmatprep.subr.mxu0 0.0
    %242 = vmatpush1.msra.mxu0 0.0
    %243 = vmatprep.subr.mxu0 0.0
    %244 = vmatpush1.msra.mxu0 0.0
    %245 = vmatprep.subr.mxu0 0.0
    %246 = vmatpush1.msra.mxu0 0.0
    %247 = vmatprep.subr.mxu0 0.0
    %248 = vmatpush1.msra.mxu0 0.0
    %249 = vmatprep.subr.mxu0 0.0
    %250 = vmatpush1.msra.mxu0 0.0
    %251 = vmatprep.subr.mxu0 0.0
    %252 = vmatpush1.msra.mxu0 0.0
    %253 = vmatprep.subr.mxu0 0.0
    %254 = vmatpush1.msra.mxu0 0.0
    %255 = vmatprep.subr.mxu0 0.0
    %256 = vmatpush1.msra.mxu0 0.0
    %257 = vmatprep.subr.mxu0 0.0
    %258 = vmatpush1.msra.mxu0 0.0
    %259 = vmatprep.mubr.f32.mxu0 0.0
    %260 = vmatmul.mubr.f32.gmra.mrb[0].mxu0 %v76
    %v261 = vpop.f32.mrb[0].mxu0
    %v262 = vadd.f32 %v193, %v261
    %v263 = vpop.f32.mrb[0].mxu0
    %264 = vdwg.mxu0
    %v265 = vadd.f32 %v167, %v262
    %vm266 = vcmp.gt.f32.partialorder %v265, 0.0
    %v267 = vmul.f32 %v265, 0.01
    %v268 = vsel %vm266, %v265, %v267
    %s269 = scalar_lea.vmem [#allocation8], 256
    %v270 = vld [vmem:[%s269] sm:$0xff]
    %v271 = vld [vmem:[%s269 + $0x8] sm:$0xff]
    %v272 = vld [vmem:[%s269 + $0x10] sm:$0xff]
    %v273 = vld [vmem:[%s269 + $0x18] sm:$0xff]
    %v274 = vld [vmem:[%s269 + $0x20] sm:$0xff]
    %v275 = vld [vmem:[%s269 + $0x28] sm:$0xff]
    %v276 = vld [vmem:[%s269 + $0x30] sm:$0xff]
    %v277 = vld [vmem:[%s269 + $0x38] sm:$0xff]
    %v278 = vld [vmem:[%s269 + $0x40] sm:$0xff]
    %v279 = vld [vmem:[%s269 + $0x48] sm:$0xff]
    %v280 = vld [vmem:[%s269 + $0x50] sm:$0xff]
    %v281 = vld [vmem:[%s269 + $0x58] sm:$0xff]
    %v282 = vld [vmem:[%s269 + $0x60] sm:$0xff]
    %v283 = vld [vmem:[%s269 + $0x68] sm:$0xff]
    %v284 = vld [vmem:[%s269 + $0x70] sm:$0xff]
    %v285 = vld [vmem:[%s269 + $0x78] sm:$0xff]
    %s286 = scalar_lea.vmem %s4, 2
    %v287 = vld [vmem:[%s286] sm:$0x1]
    %v289 = vlaneseq
    %v290 = vshrl.u32 %v289, 7
    %v291 = vsub.s32 0, %v290
    %v292 = vrot.slane %v287, %v291
    %294 = vmatprep.subr.mxu0 0.0
    %295 = vmatpush1.msra.mxu0 %v270
    %296 = vmatprep.subr.mxu0 0.0
    %297 = vmatpush1.msra.mxu0 %v271
    %298 = vmatprep.subr.mxu0 0.0
    %299 = vmatpush1.msra.mxu0 %v272
    %300 = vmatprep.subr.mxu0 0.0
    %301 = vmatpush1.msra.mxu0 %v273
    %302 = vmatprep.subr.mxu0 0.0
    %303 = vmatpush1.msra.mxu0 %v274
    %304 = vmatprep.subr.mxu0 0.0
    %305 = vmatpush1.msra.mxu0 %v275
    %306 = vmatprep.subr.mxu0 0.0
    %307 = vmatpush1.msra.mxu0 %v276
    %308 = vmatprep.subr.mxu0 0.0
    %309 = vmatpush1.msra.mxu0 %v277
    %310 = vmatprep.subr.mxu0 0.0
    %311 = vmatpush1.msra.mxu0 %v278
    %312 = vmatprep.subr.mxu0 0.0
    %313 = vmatpush1.msra.mxu0 %v279
    %314 = vmatprep.subr.mxu0 0.0
    %315 = vmatpush1.msra.mxu0 %v280
    %316 = vmatprep.subr.mxu0 0.0
    %317 = vmatpush1.msra.mxu0 %v281
    %318 = vmatprep.subr.mxu0 0.0
    %319 = vmatpush1.msra.mxu0 %v282
    %320 = vmatprep.subr.mxu0 0.0
    %321 = vmatpush1.msra.mxu0 %v283
    %322 = vmatprep.subr.mxu0 0.0
    %323 = vmatpush1.msra.mxu0 %v284
    %324 = vmatprep.subr.mxu0 0.0
    %325 = vmatpush1.msra.mxu0 %v285
    %326 = vmatprep.subr.mxu0 0.0
    %327 = vmatpush1.msra.mxu0 0.0
    %328 = vmatprep.subr.mxu0 0.0
    %329 = vmatpush1.msra.mxu0 0.0
    %330 = vmatprep.subr.mxu0 0.0
    %331 = vmatpush1.msra.mxu0 0.0
    %332 = vmatprep.subr.mxu0 0.0
    %333 = vmatpush1.msra.mxu0 0.0
    %334 = vmatprep.subr.mxu0 0.0
    %335 = vmatpush1.msra.mxu0 0.0
    %336 = vmatprep.subr.mxu0 0.0
    %337 = vmatpush1.msra.mxu0 0.0
    %338 = vmatprep.subr.mxu0 0.0
    %339 = vmatpush1.msra.mxu0 0.0
    %340 = vmatprep.subr.mxu0 0.0
    %341 = vmatpush1.msra.mxu0 0.0
    %342 = vmatprep.subr.mxu0 0.0
    %343 = vmatpush1.msra.mxu0 0.0
    %344 = vmatprep.subr.mxu0 0.0
    %345 = vmatpush1.msra.mxu0 0.0
    %346 = vmatprep.subr.mxu0 0.0
    %347 = vmatpush1.msra.mxu0 0.0
    %348 = vmatprep.subr.mxu0 0.0
    %349 = vmatpush1.msra.mxu0 0.0
    %350 = vmatprep.subr.mxu0 0.0
    %351 = vmatpush1.msra.mxu0 0.0
    %352 = vmatprep.subr.mxu0 0.0
    %353 = vmatpush1.msra.mxu0 0.0
    %354 = vmatprep.subr.mxu0 0.0
    %355 = vmatpush1.msra.mxu0 0.0
    %356 = vmatprep.subr.mxu0 0.0
    %357 = vmatpush1.msra.mxu0 0.0
    %358 = vmatprep.mubr.f32.mxu0 0.0
    %359 = vmatmul.mubr.f32.gmra.mrb[0].mxu0 %v268
    %v360 = vpop.f32.mrb[0].mxu0
    %v361 = vadd.f32 %v292, %v360
    %v362 = vpop.f32.mrb[0].mxu0
    %363 = vdwg.mxu0
    %vm364 = vcmp.gt.f32.partialorder %v361, 0.0
    %v365 = vmul.f32 %v361, 0.01
    %v366 = vsel %vm364, %v361, %v365
    %s367 = scalar_lea.vmem [#allocation8], 384
    %v368 = vld [vmem:[%s367] sm:$0xff]
    %v369 = vld [vmem:[%s367 + $0x8] sm:$0xff]
    %v370 = vld [vmem:[%s367 + $0x10] sm:$0xff]
    %v371 = vld [vmem:[%s367 + $0x18] sm:$0xff]
    %v372 = vld [vmem:[%s367 + $0x20] sm:$0xff]
    %v373 = vld [vmem:[%s367 + $0x28] sm:$0xff]
    %v374 = vld [vmem:[%s367 + $0x30] sm:$0xff]
    %v375 = vld [vmem:[%s367 + $0x38] sm:$0xff]
    %v376 = vld [vmem:[%s367 + $0x40] sm:$0xff]
    %v377 = vld [vmem:[%s367 + $0x48] sm:$0xff]
    %v378 = vld [vmem:[%s367 + $0x50] sm:$0xff]
    %v379 = vld [vmem:[%s367 + $0x58] sm:$0xff]
    %v380 = vld [vmem:[%s367 + $0x60] sm:$0xff]
    %v381 = vld [vmem:[%s367 + $0x68] sm:$0xff]
    %v382 = vld [vmem:[%s367 + $0x70] sm:$0xff]
    %v383 = vld [vmem:[%s367 + $0x78] sm:$0xff]
    %s384 = scalar_lea.vmem %s4, 3
    %v385 = vld [vmem:[%s384] sm:$0x1]
    %v387 = vlaneseq
    %v388 = vshrl.u32 %v387, 7
    %v389 = vsub.s32 0, %v388
    %v390 = vrot.slane %v385, %v389
    %392 = vmatprep.subr.mxu0 0.0
    %393 = vmatpush1.msra.mxu0 %v368
    %394 = vmatprep.subr.mxu0 0.0
    %395 = vmatpush1.msra.mxu0 %v369
    %396 = vmatprep.subr.mxu0 0.0
    %397 = vmatpush1.msra.mxu0 %v370
    %398 = vmatprep.subr.mxu0 0.0
    %399 = vmatpush1.msra.mxu0 %v371
    %400 = vmatprep.subr.mxu0 0.0
    %401 = vmatpush1.msra.mxu0 %v372
    %402 = vmatprep.subr.mxu0 0.0
    %403 = vmatpush1.msra.mxu0 %v373
    %404 = vmatprep.subr.mxu0 0.0
    %405 = vmatpush1.msra.mxu0 %v374
    %406 = vmatprep.subr.mxu0 0.0
    %407 = vmatpush1.msra.mxu0 %v375
    %408 = vmatprep.subr.mxu0 0.0
    %409 = vmatpush1.msra.mxu0 %v376
    %410 = vmatprep.subr.mxu0 0.0
    %411 = vmatpush1.msra.mxu0 %v377
    %412 = vmatprep.subr.mxu0 0.0
    %413 = vmatpush1.msra.mxu0 %v378
    %414 = vmatprep.subr.mxu0 0.0
    %415 = vmatpush1.msra.mxu0 %v379
    %416 = vmatprep.subr.mxu0 0.0
    %417 = vmatpush1.msra.mxu0 %v380
    %418 = vmatprep.subr.mxu0 0.0
    %419 = vmatpush1.msra.mxu0 %v381
    %420 = vmatprep.subr.mxu0 0.0
    %421 = vmatpush1.msra.mxu0 %v382
    %422 = vmatprep.subr.mxu0 0.0
    %423 = vmatpush1.msra.mxu0 %v383
    %424 = vmatprep.subr.mxu0 0.0
    %425 = vmatpush1.msra.mxu0 0.0
    %426 = vmatprep.subr.mxu0 0.0
    %427 = vmatpush1.msra.mxu0 0.0
    %428 = vmatprep.subr.mxu0 0.0
    %429 = vmatpush1.msra.mxu0 0.0
    %430 = vmatprep.subr.mxu0 0.0
    %431 = vmatpush1.msra.mxu0 0.0
    %432 = vmatprep.subr.mxu0 0.0
    %433 = vmatpush1.msra.mxu0 0.0
    %434 = vmatprep.subr.mxu0 0.0
    %435 = vmatpush1.msra.mxu0 0.0
    %436 = vmatprep.subr.mxu0 0.0
    %437 = vmatpush1.msra.mxu0 0.0
    %438 = vmatprep.subr.mxu0 0.0
    %439 = vmatpush1.msra.mxu0 0.0
    %440 = vmatprep.subr.mxu0 0.0
    %441 = vmatpush1.msra.mxu0 0.0
    %442 = vmatprep.subr.mxu0 0.0
    %443 = vmatpush1.msra.mxu0 0.0
    %444 = vmatprep.subr.mxu0 0.0
    %445 = vmatpush1.msra.mxu0 0.0
    %446 = vmatprep.subr.mxu0 0.0
    %447 = vmatpush1.msra.mxu0 0.0
    %448 = vmatprep.subr.mxu0 0.0
    %449 = vmatpush1.msra.mxu0 0.0
    %450 = vmatprep.subr.mxu0 0.0
    %451 = vmatpush1.msra.mxu0 0.0
    %452 = vmatprep.subr.mxu0 0.0
    %453 = vmatpush1.msra.mxu0 0.0
    %454 = vmatprep.subr.mxu0 0.0
    %455 = vmatpush1.msra.mxu0 0.0
    %456 = vmatprep.mubr.f32.mxu0 0.0
    %457 = vmatmul.mubr.f32.gmra.mrb[0].mxu0 %v366
    %v458 = vpop.f32.mrb[0].mxu0
    %v459 = vadd.f32 %v390, %v458
    %v460 = vpop.f32.mrb[0].mxu0
    %461 = vdwg.mxu0
    %vm462 = vcmp.gt.f32.partialorder %v459, 0.0
    %v463 = vmul.f32 %v459, 0.01
    %v464 = vsel %vm462, %v459, %v463
    %s465 = scalar_lea.vmem [#allocation8], 512
    %v466 = vld [vmem:[%s465] sm:$0xff]
    %v467 = vld [vmem:[%s465 + $0x8] sm:$0xff]
    %v468 = vld [vmem:[%s465 + $0x10] sm:$0xff]
    %v469 = vld [vmem:[%s465 + $0x18] sm:$0xff]
    %v470 = vld [vmem:[%s465 + $0x20] sm:$0xff]
    %v471 = vld [vmem:[%s465 + $0x28] sm:$0xff]
    %v472 = vld [vmem:[%s465 + $0x30] sm:$0xff]
    %v473 = vld [vmem:[%s465 + $0x38] sm:$0xff]
    %v474 = vld [vmem:[%s465 + $0x40] sm:$0xff]
    %v475 = vld [vmem:[%s465 + $0x48] sm:$0xff]
    %v476 = vld [vmem:[%s465 + $0x50] sm:$0xff]
    %v477 = vld [vmem:[%s465 + $0x58] sm:$0xff]
    %v478 = vld [vmem:[%s465 + $0x60] sm:$0xff]
    %v479 = vld [vmem:[%s465 + $0x68] sm:$0xff]
    %v480 = vld [vmem:[%s465 + $0x70] sm:$0xff]
    %v481 = vld [vmem:[%s465 + $0x78] sm:$0xff]
    %s482 = scalar_lea.vmem %s4, 4
    %v483 = vld [vmem:[%s482] sm:$0x1]
    %v485 = vlaneseq
    %v486 = vshrl.u32 %v485, 7
    %v487 = vsub.s32 0, %v486
    %v488 = vrot.slane %v483, %v487
    %490 = vmatprep.subr.mxu0 0.0
    %491 = vmatpush1.msra.mxu0 %v466
    %492 = vmatprep.subr.mxu0 0.0
    %493 = vmatpush1.msra.mxu0 %v467
    %494 = vmatprep.subr.mxu0 0.0
    %495 = vmatpush1.msra.mxu0 %v468
    %496 = vmatprep.subr.mxu0 0.0
    %497 = vmatpush1.msra.mxu0 %v469
    %498 = vmatprep.subr.mxu0 0.0
    %499 = vmatpush1.msra.mxu0 %v470
    %500 = vmatprep.subr.mxu0 0.0
    %501 = vmatpush1.msra.mxu0 %v471
    %502 = vmatprep.subr.mxu0 0.0
    %503 = vmatpush1.msra.mxu0 %v472
    %504 = vmatprep.subr.mxu0 0.0
    %505 = vmatpush1.msra.mxu0 %v473
    %506 = vmatprep.subr.mxu0 0.0
    %507 = vmatpush1.msra.mxu0 %v474
    %508 = vmatprep.subr.mxu0 0.0
    %509 = vmatpush1.msra.mxu0 %v475
    %510 = vmatprep.subr.mxu0 0.0
    %511 = vmatpush1.msra.mxu0 %v476
    %512 = vmatprep.subr.mxu0 0.0
    %513 = vmatpush1.msra.mxu0 %v477
    %514 = vmatprep.subr.mxu0 0.0
    %515 = vmatpush1.msra.mxu0 %v478
    %516 = vmatprep.subr.mxu0 0.0
    %517 = vmatpush1.msra.mxu0 %v479
    %518 = vmatprep.subr.mxu0 0.0
    %519 = vmatpush1.msra.mxu0 %v480
    %520 = vmatprep.subr.mxu0 0.0
    %521 = vmatpush1.msra.mxu0 %v481
    %522 = vmatprep.subr.mxu0 0.0
    %523 = vmatpush1.msra.mxu0 0.0
    %524 = vmatprep.subr.mxu0 0.0
    %525 = vmatpush1.msra.mxu0 0.0
    %526 = vmatprep.subr.mxu0 0.0
    %527 = vmatpush1.msra.mxu0 0.0
    %528 = vmatprep.subr.mxu0 0.0
    %529 = vmatpush1.msra.mxu0 0.0
    %530 = vmatprep.subr.mxu0 0.0
    %531 = vmatpush1.msra.mxu0 0.0
    %532 = vmatprep.subr.mxu0 0.0
    %533 = vmatpush1.msra.mxu0 0.0
    %534 = vmatprep.subr.mxu0 0.0
    %535 = vmatpush1.msra.mxu0 0.0
    %536 = vmatprep.subr.mxu0 0.0
    %537 = vmatpush1.msra.mxu0 0.0
    %538 = vmatprep.subr.mxu0 0.0
    %539 = vmatpush1.msra.mxu0 0.0
    %540 = vmatprep.subr.mxu0 0.0
    %541 = vmatpush1.msra.mxu0 0.0
    %542 = vmatprep.subr.mxu0 0.0
    %543 = vmatpush1.msra.mxu0 0.0
    %544 = vmatprep.subr.mxu0 0.0
    %545 = vmatpush1.msra.mxu0 0.0
    %546 = vmatprep.subr.mxu0 0.0
    %547 = vmatpush1.msra.mxu0 0.0
    %548 = vmatprep.subr.mxu0 0.0
    %549 = vmatpush1.msra.mxu0 0.0
    %550 = vmatprep.subr.mxu0 0.0
    %551 = vmatpush1.msra.mxu0 0.0
    %552 = vmatprep.subr.mxu0 0.0
    %553 = vmatpush1.msra.mxu0 0.0
    %554 = vmatprep.mubr.f32.mxu0 0.0
    %555 = vmatmul.mubr.f32.gmra.mrb[0].mxu0 %v464
    %v556 = vpop.f32.mrb[0].mxu0
    %v557 = vadd.f32 %v488, %v556
    %v558 = vpop.f32.mrb[0].mxu0
    %559 = vdwg.mxu0
    %s560 = scalar_lea.vmem [#allocation8], 640
    %v561 = vld [vmem:[%s560] sm:$0xff]
    %v562 = vld [vmem:[%s560 + $0x8] sm:$0xff]
    %v563 = vld [vmem:[%s560 + $0x10] sm:$0xff]
    %v564 = vld [vmem:[%s560 + $0x18] sm:$0xff]
    %v565 = vld [vmem:[%s560 + $0x20] sm:$0xff]
    %v566 = vld [vmem:[%s560 + $0x28] sm:$0xff]
    %v567 = vld [vmem:[%s560 + $0x30] sm:$0xff]
    %v568 = vld [vmem:[%s560 + $0x38] sm:$0xff]
    %v569 = vld [vmem:[%s560 + $0x40] sm:$0xff]
    %v570 = vld [vmem:[%s560 + $0x48] sm:$0xff]
    %v571 = vld [vmem:[%s560 + $0x50] sm:$0xff]
    %v572 = vld [vmem:[%s560 + $0x58] sm:$0xff]
    %v573 = vld [vmem:[%s560 + $0x60] sm:$0xff]
    %v574 = vld [vmem:[%s560 + $0x68] sm:$0xff]
    %v575 = vld [vmem:[%s560 + $0x70] sm:$0xff]
    %v576 = vld [vmem:[%s560 + $0x78] sm:$0xff]
    %s577 = scalar_lea.vmem %s4, 5
    %v578 = vld [vmem:[%s577] sm:$0x1]
    %v580 = vlaneseq
    %v581 = vshrl.u32 %v580, 7
    %v582 = vsub.s32 0, %v581
    %v583 = vrot.slane %v578, %v582
    %585 = vmatprep.subr.mxu0 0.0
    %586 = vmatpush1.msra.mxu0 %v561
    %587 = vmatprep.subr.mxu0 0.0
    %588 = vmatpush1.msra.mxu0 %v562
    %589 = vmatprep.subr.mxu0 0.0
    %590 = vmatpush1.msra.mxu0 %v563
    %591 = vmatprep.subr.mxu0 0.0
    %592 = vmatpush1.msra.mxu0 %v564
    %593 = vmatprep.subr.mxu0 0.0
    %594 = vmatpush1.msra.mxu0 %v565
    %595 = vmatprep.subr.mxu0 0.0
    %596 = vmatpush1.msra.mxu0 %v566
    %597 = vmatprep.subr.mxu0 0.0
    %598 = vmatpush1.msra.mxu0 %v567
    %599 = vmatprep.subr.mxu0 0.0
    %600 = vmatpush1.msra.mxu0 %v568
    %601 = vmatprep.subr.mxu0 0.0
    %602 = vmatpush1.msra.mxu0 %v569
    %603 = vmatprep.subr.mxu0 0.0
    %604 = vmatpush1.msra.mxu0 %v570
    %605 = vmatprep.subr.mxu0 0.0
    %606 = vmatpush1.msra.mxu0 %v571
    %607 = vmatprep.subr.mxu0 0.0
    %608 = vmatpush1.msra.mxu0 %v572
    %609 = vmatprep.subr.mxu0 0.0
    %610 = vmatpush1.msra.mxu0 %v573
    %611 = vmatprep.subr.mxu0 0.0
    %612 = vmatpush1.msra.mxu0 %v574
    %613 = vmatprep.subr.mxu0 0.0
    %614 = vmatpush1.msra.mxu0 %v575
    %615 = vmatprep.subr.mxu0 0.0
    %616 = vmatpush1.msra.mxu0 %v576
    %617 = vmatprep.subr.mxu0 0.0
    %618 = vmatpush1.msra.mxu0 0.0
    %619 = vmatprep.subr.mxu0 0.0
    %620 = vmatpush1.msra.mxu0 0.0
    %621 = vmatprep.subr.mxu0 0.0
    %622 = vmatpush1.msra.mxu0 0.0
    %623 = vmatprep.subr.mxu0 0.0
    %624 = vmatpush1.msra.mxu0 0.0
    %625 = vmatprep.subr.mxu0 0.0
    %626 = vmatpush1.msra.mxu0 0.0
    %627 = vmatprep.subr.mxu0 0.0
    %628 = vmatpush1.msra.mxu0 0.0
    %629 = vmatprep.subr.mxu0 0.0
    %630 = vmatpush1.msra.mxu0 0.0
    %631 = vmatprep.subr.mxu0 0.0
    %632 = vmatpush1.msra.mxu0 0.0
    %633 = vmatprep.subr.mxu0 0.0
    %634 = vmatpush1.msra.mxu0 0.0
    %635 = vmatprep.subr.mxu0 0.0
    %636 = vmatpush1.msra.mxu0 0.0
    %637 = vmatprep.subr.mxu0 0.0
    %638 = vmatpush1.msra.mxu0 0.0
    %639 = vmatprep.subr.mxu0 0.0
    %640 = vmatpush1.msra.mxu0 0.0
    %641 = vmatprep.subr.mxu0 0.0
    %642 = vmatpush1.msra.mxu0 0.0
    %643 = vmatprep.subr.mxu0 0.0
    %644 = vmatpush1.msra.mxu0 0.0
    %645 = vmatprep.subr.mxu0 0.0
    %646 = vmatpush1.msra.mxu0 0.0
    %647 = vmatprep.subr.mxu0 0.0
    %648 = vmatpush1.msra.mxu0 0.0
    %649 = vmatprep.mubr.f32.mxu0 0.0
    %650 = vmatmul.mubr.f32.gmra.mrb[0].mxu0 %v464
    %v651 = vpop.f32.mrb[0].mxu0
    %v652 = vadd.f32 %v583, %v651
    %v653 = vpop.f32.mrb[0].mxu0
    %654 = vdwg.mxu0
    %v655 = vmul.f32 %v557, 1.442695
    %v656 = vpow.pop %v655
    %v657 = vmul.f32 %v75, %v656
    %v658 = vadd.f32 %v657, %v652
    %s659 = scalar_lea.vmem [#allocation8], 768
    %v660 = vld [vmem:[%s659] sm:$0xff]
    %v661 = vld [vmem:[%s659 + $0x8] sm:$0xff]
    %v662 = vld [vmem:[%s659 + $0x10] sm:$0xff]
    %v663 = vld [vmem:[%s659 + $0x18] sm:$0xff]
    %v664 = vld [vmem:[%s659 + $0x20] sm:$0xff]
    %v665 = vld [vmem:[%s659 + $0x28] sm:$0xff]
    %v666 = vld [vmem:[%s659 + $0x30] sm:$0xff]
    %v667 = vld [vmem:[%s659 + $0x38] sm:$0xff]
    %v668 = vld [vmem:[%s659 + $0x40] sm:$0xff]
    %v669 = vld [vmem:[%s659 + $0x48] sm:$0xff]
    %v670 = vld [vmem:[%s659 + $0x50] sm:$0xff]
    %v671 = vld [vmem:[%s659 + $0x58] sm:$0xff]
    %v672 = vld [vmem:[%s659 + $0x60] sm:$0xff]
    %v673 = vld [vmem:[%s659 + $0x68] sm:$0xff]
    %v674 = vld [vmem:[%s659 + $0x70] sm:$0xff]
    %v675 = vld [vmem:[%s659 + $0x78] sm:$0xff]
    %s676 = scalar_lea.vmem %s4, 6
    %v677 = vld [vmem:[%s676] sm:$0x1]
    %v679 = vlaneseq
    %v680 = vshrl.u32 %v679, 7
    %v681 = vsub.s32 0, %v680
    %v682 = vrot.slane %v677, %v681
    %684 = vmatprep.subr.mxu0 0.0
    %685 = vmatpush1.msra.mxu0 %v660
    %686 = vmatprep.subr.mxu0 0.0
    %687 = vmatpush1.msra.mxu0 %v661
    %688 = vmatprep.subr.mxu0 0.0
    %689 = vmatpush1.msra.mxu0 %v662
    %690 = vmatprep.subr.mxu0 0.0
    %691 = vmatpush1.msra.mxu0 %v663
    %692 = vmatprep.subr.mxu0 0.0
    %693 = vmatpush1.msra.mxu0 %v664
    %694 = vmatprep.subr.mxu0 0.0
    %695 = vmatpush1.msra.mxu0 %v665
    %696 = vmatprep.subr.mxu0 0.0
    %697 = vmatpush1.msra.mxu0 %v666
    %698 = vmatprep.subr.mxu0 0.0
    %699 = vmatpush1.msra.mxu0 %v667
    %700 = vmatprep.subr.mxu0 0.0
    %701 = vmatpush1.msra.mxu0 %v668
    %702 = vmatprep.subr.mxu0 0.0
    %703 = vmatpush1.msra.mxu0 %v669
    %704 = vmatprep.subr.mxu0 0.0
    %705 = vmatpush1.msra.mxu0 %v670
    %706 = vmatprep.subr.mxu0 0.0
    %707 = vmatpush1.msra.mxu0 %v671
    %708 = vmatprep.subr.mxu0 0.0
    %709 = vmatpush1.msra.mxu0 %v672
    %710 = vmatprep.subr.mxu0 0.0
    %711 = vmatpush1.msra.mxu0 %v673
    %712 = vmatprep.subr.mxu0 0.0
    %713 = vmatpush1.msra.mxu0 %v674
    %714 = vmatprep.subr.mxu0 0.0
    %715 = vmatpush1.msra.mxu0 %v675
    %716 = vmatprep.subr.mxu0 0.0
    %717 = vmatpush1.msra.mxu0 0.0
    %718 = vmatprep.subr.mxu0 0.0
    %719 = vmatpush1.msra.mxu0 0.0
    %720 = vmatprep.subr.mxu0 0.0
    %721 = vmatpush1.msra.mxu0 0.0
    %722 = vmatprep.subr.mxu0 0.0
    %723 = vmatpush1.msra.mxu0 0.0
    %724 = vmatprep.subr.mxu0 0.0
    %725 = vmatpush1.msra.mxu0 0.0
    %726 = vmatprep.subr.mxu0 0.0
    %727 = vmatpush1.msra.mxu0 0.0
    %728 = vmatprep.subr.mxu0 0.0
    %729 = vmatpush1.msra.mxu0 0.0
    %730 = vmatprep.subr.mxu0 0.0
    %731 = vmatpush1.msra.mxu0 0.0
    %732 = vmatprep.subr.mxu0 0.0
    %733 = vmatpush1.msra.mxu0 0.0
    %734 = vmatprep.subr.mxu0 0.0
    %735 = vmatpush1.msra.mxu0 0.0
    %736 = vmatprep.subr.mxu0 0.0
    %737 = vmatpush1.msra.mxu0 0.0
    %738 = vmatprep.subr.mxu0 0.0
    %739 = vmatpush1.msra.mxu0 0.0
    %740 = vmatprep.subr.mxu0 0.0
    %741 = vmatpush1.msra.mxu0 0.0
    %742 = vmatprep.subr.mxu0 0.0
    %743 = vmatpush1.msra.mxu0 0.0
    %744 = vmatprep.subr.mxu0 0.0
    %745 = vmatpush1.msra.mxu0 0.0
    %746 = vmatprep.subr.mxu0 0.0
    %747 = vmatpush1.msra.mxu0 0.0
    %748 = vmatprep.mubr.f32.mxu0 0.0
    %749 = vmatmul.mubr.f32.gmra.mrb[0].mxu0 %v658
    %v750 = vpop.f32.mrb[0].mxu0
    %v751 = vadd.f32 %v682, %v750
    %v752 = vpop.f32.mrb[0].mxu0
    %753 = vdwg.mxu0
    %s754 = scalar_lea.vmem [#allocation8], 896
    %v755 = vld [vmem:[%s754] sm:$0xff]
    %v756 = vld [vmem:[%s754 + $0x8] sm:$0xff]
    %v757 = vld [vmem:[%s754 + $0x10] sm:$0xff]
    %v758 = vld [vmem:[%s754 + $0x18] sm:$0xff]
    %v759 = vld [vmem:[%s754 + $0x20] sm:$0xff]
    %v760 = vld [vmem:[%s754 + $0x28] sm:$0xff]
    %v761 = vld [vmem:[%s754 + $0x30] sm:$0xff]
    %v762 = vld [vmem:[%s754 + $0x38] sm:$0xff]
    %v763 = vld [vmem:[%s754 + $0x40] sm:$0xff]
    %v764 = vld [vmem:[%s754 + $0x48] sm:$0xff]
    %v765 = vld [vmem:[%s754 + $0x50] sm:$0xff]
    %v766 = vld [vmem:[%s754 + $0x58] sm:$0xff]
    %v767 = vld [vmem:[%s754 + $0x60] sm:$0xff]
    %v768 = vld [vmem:[%s754 + $0x68] sm:$0xff]
    %v769 = vld [vmem:[%s754 + $0x70] sm:$0xff]
    %v770 = vld [vmem:[%s754 + $0x78] sm:$0xff]
    %s771 = scalar_lea.vmem %s4, 7
    %v772 = vld [vmem:[%s771] sm:$0x1]
    %v774 = vlaneseq
    %v775 = vshrl.u32 %v774, 7
    %v776 = vsub.s32 0, %v775
    %v777 = vrot.slane %v772, %v776
    %779 = vmatprep.subr.mxu0 0.0
    %780 = vmatpush1.msra.mxu0 %v755
    %781 = vmatprep.subr.mxu0 0.0
    %782 = vmatpush1.msra.mxu0 %v756
    %783 = vmatprep.subr.mxu0 0.0
    %784 = vmatpush1.msra.mxu0 %v757
    %785 = vmatprep.subr.mxu0 0.0
    %786 = vmatpush1.msra.mxu0 %v758
    %787 = vmatprep.subr.mxu0 0.0
    %788 = vmatpush1.msra.mxu0 %v759
    %789 = vmatprep.subr.mxu0 0.0
    %790 = vmatpush1.msra.mxu0 %v760
    %791 = vmatprep.subr.mxu0 0.0
    %792 = vmatpush1.msra.mxu0 %v761
    %793 = vmatprep.subr.mxu0 0.0
    %794 = vmatpush1.msra.mxu0 %v762
    %795 = vmatprep.subr.mxu0 0.0
    %796 = vmatpush1.msra.mxu0 %v763
    %797 = vmatprep.subr.mxu0 0.0
    %798 = vmatpush1.msra.mxu0 %v764
    %799 = vmatprep.subr.mxu0 0.0
    %800 = vmatpush1.msra.mxu0 %v765
    %801 = vmatprep.subr.mxu0 0.0
    %802 = vmatpush1.msra.mxu0 %v766
    %803 = vmatprep.subr.mxu0 0.0
    %804 = vmatpush1.msra.mxu0 %v767
    %805 = vmatprep.subr.mxu0 0.0
    %806 = vmatpush1.msra.mxu0 %v768
    %807 = vmatprep.subr.mxu0 0.0
    %808 = vmatpush1.msra.mxu0 %v769
    %809 = vmatprep.subr.mxu0 0.0
    %810 = vmatpush1.msra.mxu0 %v770
    %811 = vmatprep.subr.mxu0 0.0
    %812 = vmatpush1.msra.mxu0 0.0
    %813 = vmatprep.subr.mxu0 0.0
    %814 = vmatpush1.msra.mxu0 0.0
    %815 = vmatprep.subr.mxu0 0.0
    %816 = vmatpush1.msra.mxu0 0.0
    %817 = vmatprep.subr.mxu0 0.0
    %818 = vmatpush1.msra.mxu0 0.0
    %819 = vmatprep.subr.mxu0 0.0
    %820 = vmatpush1.msra.mxu0 0.0
    %821 = vmatprep.subr.mxu0 0.0
    %822 = vmatpush1.msra.mxu0 0.0
    %823 = vmatprep.subr.mxu0 0.0
    %824 = vmatpush1.msra.mxu0 0.0
    %825 = vmatprep.subr.mxu0 0.0
    %826 = vmatpush1.msra.mxu0 0.0
    %827 = vmatprep.subr.mxu0 0.0
    %828 = vmatpush1.msra.mxu0 0.0
    %829 = vmatprep.subr.mxu0 0.0
    %830 = vmatpush1.msra.mxu0 0.0
    %831 = vmatprep.subr.mxu0 0.0
    %832 = vmatpush1.msra.mxu0 0.0
    %833 = vmatprep.subr.mxu0 0.0
    %834 = vmatpush1.msra.mxu0 0.0
    %835 = vmatprep.subr.mxu0 0.0
    %836 = vmatpush1.msra.mxu0 0.0
    %837 = vmatprep.subr.mxu0 0.0
    %838 = vmatpush1.msra.mxu0 0.0
    %839 = vmatprep.subr.mxu0 0.0
    %840 = vmatpush1.msra.mxu0 0.0
    %841 = vmatprep.subr.mxu0 0.0
    %842 = vmatpush1.msra.mxu0 0.0
    %843 = vmatprep.mubr.f32.mxu0 0.0
    %844 = vmatmul.mubr.f32.gmra.mrb[0].mxu0 %v76
    %v845 = vpop.f32.mrb[0].mxu0
    %v846 = vadd.f32 %v777, %v845
    %v847 = vpop.f32.mrb[0].mxu0
    %848 = vdwg.mxu0
    %v849 = vadd.f32 %v751, %v846
    %vm850 = vcmp.gt.f32.partialorder %v849, 0.0
    %v851 = vmul.f32 %v849, 0.01
    %v852 = vsel %vm850, %v849, %v851
    %s853 = scalar_lea.vmem [#allocation8], 1024
    %v854 = vld [vmem:[%s853] sm:$0xff]
    %v855 = vld [vmem:[%s853 + $0x8] sm:$0xff]
    %v856 = vld [vmem:[%s853 + $0x10] sm:$0xff]
    %v857 = vld [vmem:[%s853 + $0x18] sm:$0xff]
    %v858 = vld [vmem:[%s853 + $0x20] sm:$0xff]
    %v859 = vld [vmem:[%s853 + $0x28] sm:$0xff]
    %v860 = vld [vmem:[%s853 + $0x30] sm:$0xff]
    %v861 = vld [vmem:[%s853 + $0x38] sm:$0xff]
    %v862 = vld [vmem:[%s853 + $0x40] sm:$0xff]
    %v863 = vld [vmem:[%s853 + $0x48] sm:$0xff]
    %v864 = vld [vmem:[%s853 + $0x50] sm:$0xff]
    %v865 = vld [vmem:[%s853 + $0x58] sm:$0xff]
    %v866 = vld [vmem:[%s853 + $0x60] sm:$0xff]
    %v867 = vld [vmem:[%s853 + $0x68] sm:$0xff]
    %v868 = vld [vmem:[%s853 + $0x70] sm:$0xff]
    %v869 = vld [vmem:[%s853 + $0x78] sm:$0xff]
    %s870 = scalar_lea.vmem %s4, 8
    %v871 = vld [vmem:[%s870] sm:$0x1]
    %v873 = vlaneseq
    %v874 = vshrl.u32 %v873, 7
    %v875 = vsub.s32 0, %v874
    %v876 = vrot.slane %v871, %v875
    %878 = vmatprep.subr.mxu0 0.0
    %879 = vmatpush1.msra.mxu0 %v854
    %880 = vmatprep.subr.mxu0 0.0
    %881 = vmatpush1.msra.mxu0 %v855
    %882 = vmatprep.subr.mxu0 0.0
    %883 = vmatpush1.msra.mxu0 %v856
    %884 = vmatprep.subr.mxu0 0.0
    %885 = vmatpush1.msra.mxu0 %v857
    %886 = vmatprep.subr.mxu0 0.0
    %887 = vmatpush1.msra.mxu0 %v858
    %888 = vmatprep.subr.mxu0 0.0
    %889 = vmatpush1.msra.mxu0 %v859
    %890 = vmatprep.subr.mxu0 0.0
    %891 = vmatpush1.msra.mxu0 %v860
    %892 = vmatprep.subr.mxu0 0.0
    %893 = vmatpush1.msra.mxu0 %v861
    %894 = vmatprep.subr.mxu0 0.0
    %895 = vmatpush1.msra.mxu0 %v862
    %896 = vmatprep.subr.mxu0 0.0
    %897 = vmatpush1.msra.mxu0 %v863
    %898 = vmatprep.subr.mxu0 0.0
    %899 = vmatpush1.msra.mxu0 %v864
    %900 = vmatprep.subr.mxu0 0.0
    %901 = vmatpush1.msra.mxu0 %v865
    %902 = vmatprep.subr.mxu0 0.0
    %903 = vmatpush1.msra.mxu0 %v866
    %904 = vmatprep.subr.mxu0 0.0
    %905 = vmatpush1.msra.mxu0 %v867
    %906 = vmatprep.subr.mxu0 0.0
    %907 = vmatpush1.msra.mxu0 %v868
    %908 = vmatprep.subr.mxu0 0.0
    %909 = vmatpush1.msra.mxu0 %v869
    %910 = vmatprep.subr.mxu0 0.0
    %911 = vmatpush1.msra.mxu0 0.0
    %912 = vmatprep.subr.mxu0 0.0
    %913 = vmatpush1.msra.mxu0 0.0
    %914 = vmatprep.subr.mxu0 0.0
    %915 = vmatpush1.msra.mxu0 0.0
    %916 = vmatprep.subr.mxu0 0.0
    %917 = vmatpush1.msra.mxu0 0.0
    %918 = vmatprep.subr.mxu0 0.0
    %919 = vmatpush1.msra.mxu0 0.0
    %920 = vmatprep.subr.mxu0 0.0
    %921 = vmatpush1.msra.mxu0 0.0
    %922 = vmatprep.subr.mxu0 0.0
    %923 = vmatpush1.msra.mxu0 0.0
    %924 = vmatprep.subr.mxu0 0.0
    %925 = vmatpush1.msra.mxu0 0.0
    %926 = vmatprep.subr.mxu0 0.0
    %927 = vmatpush1.msra.mxu0 0.0
    %928 = vmatprep.subr.mxu0 0.0
    %929 = vmatpush1.msra.mxu0 0.0
    %930 = vmatprep.subr.mxu0 0.0
    %931 = vmatpush1.msra.mxu0 0.0
    %932 = vmatprep.subr.mxu0 0.0
    %933 = vmatpush1.msra.mxu0 0.0
    %934 = vmatprep.subr.mxu0 0.0
    %935 = vmatpush1.msra.mxu0 0.0
    %936 = vmatprep.subr.mxu0 0.0
    %937 = vmatpush1.msra.mxu0 0.0
    %938 = vmatprep.subr.mxu0 0.0
    %939 = vmatpush1.msra.mxu0 0.0
    %940 = vmatprep.subr.mxu0 0.0
    %941 = vmatpush1.msra.mxu0 0.0
    %942 = vmatprep.mubr.f32.mxu0 0.0
    %943 = vmatmul.mubr.f32.gmra.mrb[0].mxu0 %v852
    %v944 = vpop.f32.mrb[0].mxu0
    %v945 = vadd.f32 %v876, %v944
    %v946 = vpop.f32.mrb[0].mxu0
    %947 = vdwg.mxu0
    %vm948 = vcmp.gt.f32.partialorder %v945, 0.0
    %v949 = vmul.f32 %v945, 0.01
    %v950 = vsel %vm948, %v945, %v949
    %s951 = scalar_lea.vmem [#allocation8], 1152
    %v952 = vld [vmem:[%s951] sm:$0xff]
    %v953 = vld [vmem:[%s951 + $0x8] sm:$0xff]
    %v954 = vld [vmem:[%s951 + $0x10] sm:$0xff]
    %v955 = vld [vmem:[%s951 + $0x18] sm:$0xff]
    %v956 = vld [vmem:[%s951 + $0x20] sm:$0xff]
    %v957 = vld [vmem:[%s951 + $0x28] sm:$0xff]
    %v958 = vld [vmem:[%s951 + $0x30] sm:$0xff]
    %v959 = vld [vmem:[%s951 + $0x38] sm:$0xff]
    %v960 = vld [vmem:[%s951 + $0x40] sm:$0xff]
    %v961 = vld [vmem:[%s951 + $0x48] sm:$0xff]
    %v962 = vld [vmem:[%s951 + $0x50] sm:$0xff]
    %v963 = vld [vmem:[%s951 + $0x58] sm:$0xff]
    %v964 = vld [vmem:[%s951 + $0x60] sm:$0xff]
    %v965 = vld [vmem:[%s951 + $0x68] sm:$0xff]
    %v966 = vld [vmem:[%s951 + $0x70] sm:$0xff]
    %v967 = vld [vmem:[%s951 + $0x78] sm:$0xff]
    %s968 = scalar_lea.vmem %s4, 9
    %v969 = vld [vmem:[%s968] sm:$0x1]
    %v971 = vlaneseq
    %v972 = vshrl.u32 %v971, 7
    %v973 = vsub.s32 0, %v972
    %v974 = vrot.slane %v969, %v973
    %976 = vmatprep.subr.mxu0 0.0
    %977 = vmatpush1.msra.mxu0 %v952
    %978 = vmatprep.subr.mxu0 0.0
    %979 = vmatpush1.msra.mxu0 %v953
    %980 = vmatprep.subr.mxu0 0.0
    %981 = vmatpush1.msra.mxu0 %v954
    %982 = vmatprep.subr.mxu0 0.0
    %983 = vmatpush1.msra.mxu0 %v955
    %984 = vmatprep.subr.mxu0 0.0
    %985 = vmatpush1.msra.mxu0 %v956
    %986 = vmatprep.subr.mxu0 0.0
    %987 = vmatpush1.msra.mxu0 %v957
    %988 = vmatprep.subr.mxu0 0.0
    %989 = vmatpush1.msra.mxu0 %v958
    %990 = vmatprep.subr.mxu0 0.0
    %991 = vmatpush1.msra.mxu0 %v959
    %992 = vmatprep.subr.mxu0 0.0
    %993 = vmatpush1.msra.mxu0 %v960
    %994 = vmatprep.subr.mxu0 0.0
    %995 = vmatpush1.msra.mxu0 %v961
    %996 = vmatprep.subr.mxu0 0.0
    %997 = vmatpush1.msra.mxu0 %v962
    %998 = vmatprep.subr.mxu0 0.0
    %999 = vmatpush1.msra.mxu0 %v963
    %1000 = vmatprep.subr.mxu0 0.0
    %1001 = vmatpush1.msra.mxu0 %v964
    %1002 = vmatprep.subr.mxu0 0.0
    %1003 = vmatpush1.msra.mxu0 %v965
    %1004 = vmatprep.subr.mxu0 0.0
    %1005 = vmatpush1.msra.mxu0 %v966
    %1006 = vmatprep.subr.mxu0 0.0
    %1007 = vmatpush1.msra.mxu0 %v967
    %1008 = vmatprep.subr.mxu0 0.0
    %1009 = vmatpush1.msra.mxu0 0.0
    %1010 = vmatprep.subr.mxu0 0.0
    %1011 = vmatpush1.msra.mxu0 0.0
    %1012 = vmatprep.subr.mxu0 0.0
    %1013 = vmatpush1.msra.mxu0 0.0
    %1014 = vmatprep.subr.mxu0 0.0
    %1015 = vmatpush1.msra.mxu0 0.0
    %1016 = vmatprep.subr.mxu0 0.0
    %1017 = vmatpush1.msra.mxu0 0.0
    %1018 = vmatprep.subr.mxu0 0.0
    %1019 = vmatpush1.msra.mxu0 0.0
    %1020 = vmatprep.subr.mxu0 0.0
    %1021 = vmatpush1.msra.mxu0 0.0
    %1022 = vmatprep.subr.mxu0 0.0
    %1023 = vmatpush1.msra.mxu0 0.0
    %1024 = vmatprep.subr.mxu0 0.0
    %1025 = vmatpush1.msra.mxu0 0.0
    %1026 = vmatprep.subr.mxu0 0.0
    %1027 = vmatpush1.msra.mxu0 0.0
    %1028 = vmatprep.subr.mxu0 0.0
    %1029 = vmatpush1.msra.mxu0 0.0
    %1030 = vmatprep.subr.mxu0 0.0
    %1031 = vmatpush1.msra.mxu0 0.0
    %1032 = vmatprep.subr.mxu0 0.0
    %1033 = vmatpush1.msra.mxu0 0.0
    %1034 = vmatprep.subr.mxu0 0.0
    %1035 = vmatpush1.msra.mxu0 0.0
    %1036 = vmatprep.subr.mxu0 0.0
    %1037 = vmatpush1.msra.mxu0 0.0
    %1038 = vmatprep.subr.mxu0 0.0
    %1039 = vmatpush1.msra.mxu0 0.0
    %1040 = vmatprep.mubr.f32.mxu0 0.0
    %1041 = vmatmul.mubr.f32.gmra.mrb[0].mxu0 %v950
    %v1042 = vpop.f32.mrb[0].mxu0
    %v1043 = vadd.f32 %v974, %v1042
    %v1044 = vpop.f32.mrb[0].mxu0
    %1045 = vdwg.mxu0
    %vm1046 = vcmp.gt.f32.partialorder %v1043, 0.0
    %v1047 = vmul.f32 %v1043, 0.01
    %v1048 = vsel %vm1046, %v1043, %v1047
    %s1049 = scalar_lea.vmem [#allocation8], 1280
    %v1050 = vld [vmem:[%s1049] sm:$0xff]
    %v1051 = vld [vmem:[%s1049 + $0x8] sm:$0xff]
    %v1052 = vld [vmem:[%s1049 + $0x10] sm:$0xff]
    %v1053 = vld [vmem:[%s1049 + $0x18] sm:$0xff]
    %v1054 = vld [vmem:[%s1049 + $0x20] sm:$0xff]
    %v1055 = vld [vmem:[%s1049 + $0x28] sm:$0xff]
    %v1056 = vld [vmem:[%s1049 + $0x30] sm:$0xff]
    %v1057 = vld [vmem:[%s1049 + $0x38] sm:$0xff]
    %v1058 = vld [vmem:[%s1049 + $0x40] sm:$0xff]
    %v1059 = vld [vmem:[%s1049 + $0x48] sm:$0xff]
    %v1060 = vld [vmem:[%s1049 + $0x50] sm:$0xff]
    %v1061 = vld [vmem:[%s1049 + $0x58] sm:$0xff]
    %v1062 = vld [vmem:[%s1049 + $0x60] sm:$0xff]
    %v1063 = vld [vmem:[%s1049 + $0x68] sm:$0xff]
    %v1064 = vld [vmem:[%s1049 + $0x70] sm:$0xff]
    %v1065 = vld [vmem:[%s1049 + $0x78] sm:$0xff]
    %s1066 = scalar_lea.vmem %s4, 10
    %v1067 = vld [vmem:[%s1066] sm:$0x1]
    %v1069 = vlaneseq
    %v1070 = vshrl.u32 %v1069, 7
    %v1071 = vsub.s32 0, %v1070
    %v1072 = vrot.slane %v1067, %v1071
    %1074 = vmatprep.subr.mxu0 0.0
    %1075 = vmatpush1.msra.mxu0 %v1050
    %1076 = vmatprep.subr.mxu0 0.0
    %1077 = vmatpush1.msra.mxu0 %v1051
    %1078 = vmatprep.subr.mxu0 0.0
    %1079 = vmatpush1.msra.mxu0 %v1052
    %1080 = vmatprep.subr.mxu0 0.0
    %1081 = vmatpush1.msra.mxu0 %v1053
    %1082 = vmatprep.subr.mxu0 0.0
    %1083 = vmatpush1.msra.mxu0 %v1054
    %1084 = vmatprep.subr.mxu0 0.0
    %1085 = vmatpush1.msra.mxu0 %v1055
    %1086 = vmatprep.subr.mxu0 0.0
    %1087 = vmatpush1.msra.mxu0 %v1056
    %1088 = vmatprep.subr.mxu0 0.0
    %1089 = vmatpush1.msra.mxu0 %v1057
    %1090 = vmatprep.subr.mxu0 0.0
    %1091 = vmatpush1.msra.mxu0 %v1058
    %1092 = vmatprep.subr.mxu0 0.0
    %1093 = vmatpush1.msra.mxu0 %v1059
    %1094 = vmatprep.subr.mxu0 0.0
    %1095 = vmatpush1.msra.mxu0 %v1060
    %1096 = vmatprep.subr.mxu0 0.0
    %1097 = vmatpush1.msra.mxu0 %v1061
    %1098 = vmatprep.subr.mxu0 0.0
    %1099 = vmatpush1.msra.mxu0 %v1062
    %1100 = vmatprep.subr.mxu0 0.0
    %1101 = vmatpush1.msra.mxu0 %v1063
    %1102 = vmatprep.subr.mxu0 0.0
    %1103 = vmatpush1.msra.mxu0 %v1064
    %1104 = vmatprep.subr.mxu0 0.0
    %1105 = vmatpush1.msra.mxu0 %v1065
    %1106 = vmatprep.subr.mxu0 0.0
    %1107 = vmatpush1.msra.mxu0 0.0
    %1108 = vmatprep.subr.mxu0 0.0
    %1109 = vmatpush1.msra.mxu0 0.0
    %1110 = vmatprep.subr.mxu0 0.0
    %1111 = vmatpush1.msra.mxu0 0.0
    %1112 = vmatprep.subr.mxu0 0.0
    %1113 = vmatpush1.msra.mxu0 0.0
    %1114 = vmatprep.subr.mxu0 0.0
    %1115 = vmatpush1.msra.mxu0 0.0
    %1116 = vmatprep.subr.mxu0 0.0
    %1117 = vmatpush1.msra.mxu0 0.0
    %1118 = vmatprep.subr.mxu0 0.0
    %1119 = vmatpush1.msra.mxu0 0.0
    %1120 = vmatprep.subr.mxu0 0.0
    %1121 = vmatpush1.msra.mxu0 0.0
    %1122 = vmatprep.subr.mxu0 0.0
    %1123 = vmatpush1.msra.mxu0 0.0
    %1124 = vmatprep.subr.mxu0 0.0
    %1125 = vmatpush1.msra.mxu0 0.0
    %1126 = vmatprep.subr.mxu0 0.0
    %1127 = vmatpush1.msra.mxu0 0.0
    %1128 = vmatprep.subr.mxu0 0.0
    %1129 = vmatpush1.msra.mxu0 0.0
    %1130 = vmatprep.subr.mxu0 0.0
    %1131 = vmatpush1.msra.mxu0 0.0
    %1132 = vmatprep.subr.mxu0 0.0
    %1133 = vmatpush1.msra.mxu0 0.0
    %1134 = vmatprep.subr.mxu0 0.0
    %1135 = vmatpush1.msra.mxu0 0.0
    %1136 = vmatprep.subr.mxu0 0.0
    %1137 = vmatpush1.msra.mxu0 0.0
    %1138 = vmatprep.mubr.f32.mxu0 0.0
    %1139 = vmatmul.mubr.f32.gmra.mrb[0].mxu0 %v1048
    %v1140 = vpop.f32.mrb[0].mxu0
    %v1141 = vadd.f32 %v1072, %v1140
    %v1142 = vpop.f32.mrb[0].mxu0
    %1143 = vdwg.mxu0
    %s1144 = scalar_lea.vmem [#allocation8], 1408
    %v1145 = vld [vmem:[%s1144] sm:$0xff]
    %v1146 = vld [vmem:[%s1144 + $0x8] sm:$0xff]
    %v1147 = vld [vmem:[%s1144 + $0x10] sm:$0xff]
    %v1148 = vld [vmem:[%s1144 + $0x18] sm:$0xff]
    %v1149 = vld [vmem:[%s1144 + $0x20] sm:$0xff]
    %v1150 = vld [vmem:[%s1144 + $0x28] sm:$0xff]
    %v1151 = vld [vmem:[%s1144 + $0x30] sm:$0xff]
    %v1152 = vld [vmem:[%s1144 + $0x38] sm:$0xff]
    %v1153 = vld [vmem:[%s1144 + $0x40] sm:$0xff]
    %v1154 = vld [vmem:[%s1144 + $0x48] sm:$0xff]
    %v1155 = vld [vmem:[%s1144 + $0x50] sm:$0xff]
    %v1156 = vld [vmem:[%s1144 + $0x58] sm:$0xff]
    %v1157 = vld [vmem:[%s1144 + $0x60] sm:$0xff]
    %v1158 = vld [vmem:[%s1144 + $0x68] sm:$0xff]
    %v1159 = vld [vmem:[%s1144 + $0x70] sm:$0xff]
    %v1160 = vld [vmem:[%s1144 + $0x78] sm:$0xff]
    %s1161 = scalar_lea.vmem %s4, 11
    %v1162 = vld [vmem:[%s1161] sm:$0x1]
    %v1164 = vlaneseq
    %v1165 = vshrl.u32 %v1164, 7
    %v1166 = vsub.s32 0, %v1165
    %v1167 = vrot.slane %v1162, %v1166
    %1169 = vmatprep.subr.mxu0 0.0
    %1170 = vmatpush1.msra.mxu0 %v1145
    %1171 = vmatprep.subr.mxu0 0.0
    %1172 = vmatpush1.msra.mxu0 %v1146
    %1173 = vmatprep.subr.mxu0 0.0
    %1174 = vmatpush1.msra.mxu0 %v1147
    %1175 = vmatprep.subr.mxu0 0.0
    %1176 = vmatpush1.msra.mxu0 %v1148
    %1177 = vmatprep.subr.mxu0 0.0
    %1178 = vmatpush1.msra.mxu0 %v1149
    %1179 = vmatprep.subr.mxu0 0.0
    %1180 = vmatpush1.msra.mxu0 %v1150
    %1181 = vmatprep.subr.mxu0 0.0
    %1182 = vmatpush1.msra.mxu0 %v1151
    %1183 = vmatprep.subr.mxu0 0.0
    %1184 = vmatpush1.msra.mxu0 %v1152
    %1185 = vmatprep.subr.mxu0 0.0
    %1186 = vmatpush1.msra.mxu0 %v1153
    %1187 = vmatprep.subr.mxu0 0.0
    %1188 = vmatpush1.msra.mxu0 %v1154
    %1189 = vmatprep.subr.mxu0 0.0
    %1190 = vmatpush1.msra.mxu0 %v1155
    %1191 = vmatprep.subr.mxu0 0.0
    %1192 = vmatpush1.msra.mxu0 %v1156
    %1193 = vmatprep.subr.mxu0 0.0
    %1194 = vmatpush1.msra.mxu0 %v1157
    %1195 = vmatprep.subr.mxu0 0.0
    %1196 = vmatpush1.msra.mxu0 %v1158
    %1197 = vmatprep.subr.mxu0 0.0
    %1198 = vmatpush1.msra.mxu0 %v1159
    %1199 = vmatprep.subr.mxu0 0.0
    %1200 = vmatpush1.msra.mxu0 %v1160
    %1201 = vmatprep.subr.mxu0 0.0
    %1202 = vmatpush1.msra.mxu0 0.0
    %1203 = vmatprep.subr.mxu0 0.0
    %1204 = vmatpush1.msra.mxu0 0.0
    %1205 = vmatprep.subr.mxu0 0.0
    %1206 = vmatpush1.msra.mxu0 0.0
    %1207 = vmatprep.subr.mxu0 0.0
    %1208 = vmatpush1.msra.mxu0 0.0
    %1209 = vmatprep.subr.mxu0 0.0
    %1210 = vmatpush1.msra.mxu0 0.0
    %1211 = vmatprep.subr.mxu0 0.0
    %1212 = vmatpush1.msra.mxu0 0.0
    %1213 = vmatprep.subr.mxu0 0.0
    %1214 = vmatpush1.msra.mxu0 0.0
    %1215 = vmatprep.subr.mxu0 0.0
    %1216 = vmatpush1.msra.mxu0 0.0
    %1217 = vmatprep.subr.mxu0 0.0
    %1218 = vmatpush1.msra.mxu0 0.0
    %1219 = vmatprep.subr.mxu0 0.0
    %1220 = vmatpush1.msra.mxu0 0.0
    %1221 = vmatprep.subr.mxu0 0.0
    %1222 = vmatpush1.msra.mxu0 0.0
    %1223 = vmatprep.subr.mxu0 0.0
    %1224 = vmatpush1.msra.mxu0 0.0
    %1225 = vmatprep.subr.mxu0 0.0
    %1226 = vmatpush1.msra.mxu0 0.0
    %1227 = vmatprep.subr.mxu0 0.0
    %1228 = vmatpush1.msra.mxu0 0.0
    %1229 = vmatprep.subr.mxu0 0.0
    %1230 = vmatpush1.msra.mxu0 0.0
    %1231 = vmatprep.subr.mxu0 0.0
    %1232 = vmatpush1.msra.mxu0 0.0
    %1233 = vmatprep.mubr.f32.mxu0 0.0
    %1234 = vmatmul.mubr.f32.gmra.mrb[0].mxu0 %v1048
    %v1235 = vpop.f32.mrb[0].mxu0
    %v1236 = vadd.f32 %v1167, %v1235
    %v1237 = vpop.f32.mrb[0].mxu0
    %1238 = vdwg.mxu0
    %v1239 = vmul.f32 %v1141, 1.442695
    %v1240 = vpow.pop %v1239
    %v1241 = vmul.f32 %v74, %v1240
    %v1242 = vadd.f32 %v1241, %v1236
    %1243 = vst [vmem:[#allocation10] sm:$0xff] %v658
    %1244 = vst [vmem:[#allocation11] sm:$0xff] %v1242
    %v1245 = vadd.f32 %v557, %v1141
    %1246 = vadd.xlane.f32.xlu0 %v1245
    %v1247 = vpop.xlane.xlu0 %1246
    %1248 = vst [vmem:[#allocation13] sm:$0xff] %v1247
    // Predicated region
    $region38: #{tpu_custom_call.1} parent=1 // pred_check
      _
    $region39: #{tpu_custom_call.1} parent=1 // pred_check_branch
      %1250 = sbr.rel (0) target = $region41
    $region40: #{tpu_custom_call.1} parent=1 // pred_region
      %s1252 = ssub.s32 128, 128
      %1253 = vsyncadd [#allocation4], %s1252
      %s1255 = sshll.u32 [#allocation10], 4
      %s1256 = int_to_ptr.vmem [resolvable:$true] %s1255
      %1258 = dma.vmem_to_hbm [thread:$0]  %s1256, 128, %s5, [#allocation4]
    $region41: #{tpu_custom_call.1} parent=1 // pred_fallthru
      _
    // Predicated region
    $region42: #{tpu_custom_call.1} parent=1 // pred_check
      _
    $region43: #{tpu_custom_call.1} parent=1 // pred_check_branch
      %1260 = sbr.rel (0) target = $region45
    $region44: #{tpu_custom_call.1} parent=1 // pred_region
      %s1262 = ssub.s32 128, 128
      %1263 = vsyncadd [#allocation12], %s1262
      %s1265 = sshll.u32 [#allocation11], 4
      %s1266 = int_to_ptr.vmem [resolvable:$true] %s1265
      %1268 = dma.vmem_to_hbm [thread:$0]  %s1266, 128, %s6, [#allocation12]
    $region45: #{tpu_custom_call.1} parent=1 // pred_fallthru
      _
    // Predicated region
    $region46: #{tpu_custom_call.1} parent=1 // pred_check
      _
    $region47: #{tpu_custom_call.1} parent=1 // pred_check_branch
      %1270 = sbr.rel (0) target = $region49
    $region48: #{tpu_custom_call.1} parent=1 // pred_region
      %s1272 = ssub.s32 128, 128
      %1273 = vsyncadd [#allocation12], %s1272
      %s1275 = sshll.u32 [#allocation13], 4
      %s1276 = int_to_ptr.vmem [resolvable:$true] %s1275
      %1278 = dma.vmem_to_hbm [thread:$0]  %s1276, 128, %s7, [#allocation12]
    $region49: #{tpu_custom_call.1} parent=1 // pred_fallthru
      _
    // Predicated region
    $region50: #{tpu_custom_call.1} parent=1 // pred_check
      _
    $region51: #{tpu_custom_call.1} parent=1 // pred_check_branch
      %1280 = sbr.rel (0) target = $region53
    $region52: #{tpu_custom_call.1} parent=1 // pred_region
      %1281 = dma.done [#allocation4], 128
    $region53: #{tpu_custom_call.1} parent=1 // pred_fallthru
      _
    // Predicated region
    $region54: #{tpu_custom_call.1} parent=1 // pred_check
      _
    $region55: #{tpu_custom_call.1} parent=1 // pred_check_branch
      %1283 = sbr.rel (0) target = $region57
    $region56: #{tpu_custom_call.1} parent=1 // pred_region
      %1284 = dma.done [#allocation12], 128
    $region57: #{tpu_custom_call.1} parent=1 // pred_fallthru
      _
    // Predicated region
    $region58: #{tpu_custom_call.1} parent=1 // pred_check
      _
    $region59: #{tpu_custom_call.1} parent=1 // pred_check_branch
      %1286 = sbr.rel (0) target = $region61
    $region60: #{tpu_custom_call.1} parent=1 // pred_region
      %1287 = dma.done [#allocation12], 128
    $region61: #{tpu_custom_call.1} parent=1 // pred_fallthru
      _
    %1288 = vsyncpa [#allocation3], 1
    %1289 = vsyncpa [#allocation6], 1
    %1290 = vsyncpa [#allocation9], 1
    %1291 = vsyncpa [#allocation4], 1
    %1292 = vsyncpa [#allocation12], 1

</llo_original>
